<compile_context>
chip_gen: v7x
topology: tpu7x:2x2x1
jax: 0.10.0
libtpu: 0.0.40
codegen_flags: <defaults>
</compile_context>

<pallas_src>
import jax
import jax.numpy as jnp
from jax.experimental import pallas as pl
from jax.experimental.pallas import tpu as pltpu


_LAYER_DIMS = [(784, 256), (256, 256), (256, 256), (256, 128), (128, 128), (128, 10)]
_LANE = 128  # pad fc6 output features to one full lane group


def _mlp_kernel(x_ref,
                w1, b1, w2, b2, w3, b3, w4, b4, w5, b5, w6, b6,
                o_ref):
    """Fused 6-layer MLP: relu(x@W+b) x5, then linear fc6. All in VMEM."""

    def layer(h_bf16, w_ref, b_ref, relu):
        acc = jnp.dot(h_bf16, w_ref[...], preferred_element_type=jnp.float32)
        acc = acc + b_ref[...]            # (1, N) f32 bias broadcasts over rows
        if relu:
            acc = jnp.maximum(acc, 0.0)
        return acc

    h = x_ref[...]                        # already bf16
    h = layer(h, w1, b1, True).astype(jnp.bfloat16)
    h = layer(h, w2, b2, True).astype(jnp.bfloat16)
    h = layer(h, w3, b3, True).astype(jnp.bfloat16)
    h = layer(h, w4, b4, True).astype(jnp.bfloat16)
    h = layer(h, w5, b5, True).astype(jnp.bfloat16)
    # Dropout (eval mode) == identity.
    o_ref[...] = layer(h, w6, b6, False)  # (TM, 128) f32, lane-dense store


def init_params(key):
    """PyTorch nn.Linear default init: U(-1/sqrt(fan_in), 1/sqrt(fan_in))."""
    params = []
    for fan_in, fan_out in _LAYER_DIMS:
        key, kw, kb = jax.random.split(key, 3)
        bound = 1.0 / float(fan_in) ** 0.5
        w = jax.random.uniform(kw, (fan_out, fan_in), jnp.float32, -bound, bound)
        b = jax.random.uniform(kb, (fan_out,), jnp.float32, -bound, bound)
        params.append((w, b))
    return params


def prepare_params(params):
    """One-time prep (hoisted out of the hot path).

    (out,in) f32 -> (in,out) bf16 weights, (out,) -> (1,out) f32 biases.
    fc6 is zero-padded from 10 -> 128 output features so the kernel's final
    store is lane-dense; padded columns/bias entries are zero (harmless).
    """
    prepared = []
    for li, (w, b) in enumerate(params):
        wt = jnp.asarray(w.T, dtype=jnp.bfloat16)              # (in, out)
        bb = jnp.asarray(b, dtype=jnp.float32).reshape(1, -1)   # (1, out)
        if li == len(params) - 1 and wt.shape[1] < _LANE:
            pad = _LANE - wt.shape[1]
            wt = jnp.pad(wt, ((0, 0), (0, pad)))
            bb = jnp.pad(bb, ((0, 0), (0, pad)))
        prepared.append(wt)
        prepared.append(bb)
    return tuple(prepared)


def net_forward(x, prepared, *, tm=256):
    """x: any shape that flattens to (B, 784) -> (B, 10) logits (f32)."""
    # Cast once in the wrapper: the kernel uses bf16 operands on the MXU
    # anyway, and this halves the input DMA traffic.
    x2d = jnp.reshape(x, (-1, 784)).astype(jnp.bfloat16)
    B = x2d.shape[0]

    if B <= tm:
        # Single full-array block: block_shape == full array dims is legal.
        TM, Bp, xin, grid = B, B, x2d, (1,)
    else:
        TM = tm
        Bp = ((B + TM - 1) // TM) * TM
        xin = x2d if Bp == B else jnp.zeros((Bp, 784), jnp.bfloat16).at[:B].set(x2d)
        grid = (Bp // TM,)

    in_specs = [pl.BlockSpec((TM, 784), lambda i: (i, 0))]
    for p in prepared:
        # Same block (0,0) every grid step -> weights stay resident in VMEM.
        in_specs.append(pl.BlockSpec(p.shape, lambda i: (0, 0)))

    out = pl.pallas_call(
        _mlp_kernel,
        out_shape=jax.ShapeDtypeStruct((Bp, _LANE), jnp.float32),
        grid=grid,
        in_specs=in_specs,
        out_specs=pl.BlockSpec((TM, _LANE), lambda i: (i, 0)),
        compiler_params=pltpu.CompilerParams(
            dimension_semantics=("parallel",)),
    )(xin, *prepared)

    return out[:B, :10]


def _reference_forward(x, prepared):
    """Pure-JAX reference with the same bf16 quantization (for validation)."""
    h = jnp.reshape(x, (-1, 784)).astype(jnp.bfloat16)
    ws = prepared[0::2]
    bs = prepared[1::2]
    for li, (w, b) in enumerate(zip(ws, bs)):
        h = jnp.dot(h, w, preferred_element_type=jnp.float32) + b
        if li < len(ws) - 1:
            h = jnp.maximum(h, 0.0).astype(jnp.bfloat16)
    return h[:, :10]


if __name__ == "__main__":
    key = jax.random.PRNGKey(0)
    key, xkey = jax.random.split(key)

    # Small shapes consistent with the module: input flattens to (B, 784).
    B = 2
    x = jax.random.normal(xkey, (B, 1, 28, 28), dtype=jnp.float32)

    params = init_params(key)
    prepared = prepare_params(params)

    y = net_forward(x, prepared)
    y = jax.block_until_ready(y)
    assert y.shape == (B, 10), y.shape

    y_ref = jax.block_until_ready(_reference_forward(x, prepared))
    assert jnp.allclose(y, y_ref, rtol=2e-2, atol=2e-2), (y, y_ref)

    print("KERNEL_OK")
</pallas_src>

<mosaic_0001>
module attributes {stable_mosaic.version = 11 : i64} {
  func.func @_mlp_kernel(%arg0: i32, %arg1: memref<2x784xbf16, #tpu.memory_space<vmem>>, %arg2: memref<784x256xbf16, #tpu.memory_space<vmem>>, %arg3: memref<1x256xf32, #tpu.memory_space<vmem>>, %arg4: memref<256x256xbf16, #tpu.memory_space<vmem>>, %arg5: memref<1x256xf32, #tpu.memory_space<vmem>>, %arg6: memref<256x256xbf16, #tpu.memory_space<vmem>>, %arg7: memref<1x256xf32, #tpu.memory_space<vmem>>, %arg8: memref<256x128xbf16, #tpu.memory_space<vmem>>, %arg9: memref<1x128xf32, #tpu.memory_space<vmem>>, %arg10: memref<128x128xbf16, #tpu.memory_space<vmem>>, %arg11: memref<1x128xf32, #tpu.memory_space<vmem>>, %arg12: memref<128x128xbf16, #tpu.memory_space<vmem>>, %arg13: memref<1x128xf32, #tpu.memory_space<vmem>>, %arg14: memref<2x128xf32, #tpu.memory_space<vmem>>) attributes {dimension_semantics = [#tpu.dimension_semantics<parallel>], iteration_bounds = array<i64: 1>, scalar_prefetch = 0 : i64, scratch_operands = 0 : i64, tpu.core_type = #tpu.core_type<tc>, window_params = [{transform_indices = @transform_0, window_bounds = array<i64: 2, 784>}, {pipeline_mode = #tpu.pipeline_mode<synchronous>, transform_indices = @transform_1, window_bounds = array<i64: 784, 256>}, {pipeline_mode = #tpu.pipeline_mode<synchronous>, transform_indices = @transform_2, window_bounds = array<i64: 1, 256>}, {pipeline_mode = #tpu.pipeline_mode<synchronous>, transform_indices = @transform_3, window_bounds = array<i64: 256, 256>}, {pipeline_mode = #tpu.pipeline_mode<synchronous>, transform_indices = @transform_4, window_bounds = array<i64: 1, 256>}, {pipeline_mode = #tpu.pipeline_mode<synchronous>, transform_indices = @transform_5, window_bounds = array<i64: 256, 256>}, {pipeline_mode = #tpu.pipeline_mode<synchronous>, transform_indices = @transform_6, window_bounds = array<i64: 1, 256>}, {pipeline_mode = #tpu.pipeline_mode<synchronous>, transform_indices = @transform_7, window_bounds = array<i64: 256, 128>}, {pipeline_mode = #tpu.pipeline_mode<synchronous>, transform_indices = @transform_8, window_bounds = array<i64: 1, 128>}, {pipeline_mode = #tpu.pipeline_mode<synchronous>, transform_indices = @transform_9, window_bounds = array<i64: 128, 128>}, {pipeline_mode = #tpu.pipeline_mode<synchronous>, transform_indices = @transform_10, window_bounds = array<i64: 1, 128>}, {pipeline_mode = #tpu.pipeline_mode<synchronous>, transform_indices = @transform_11, window_bounds = array<i64: 128, 128>}, {pipeline_mode = #tpu.pipeline_mode<synchronous>, transform_indices = @transform_12, window_bounds = array<i64: 1, 128>}, {transform_indices = @transform_13, window_bounds = array<i64: 2, 128>}]} {
    %c0 = arith.constant 0 : index
    %c0_0 = arith.constant 0 : index
    %0 = vector.load %arg1[%c0, %c0_0] : memref<2x784xbf16, #tpu.memory_space<vmem>>, vector<2x784xbf16>
    %c0_1 = arith.constant 0 : index
    %c0_2 = arith.constant 0 : index
    %1 = vector.load %arg2[%c0_1, %c0_2] : memref<784x256xbf16, #tpu.memory_space<vmem>>, vector<784x256xbf16>
    %cst = arith.constant dense<0.000000e+00> : vector<2x256xf32>
    %2 = tpu.matmul %0, %1, %cst {dimension_numbers = #tpu.dot_dimension_numbers<[1], [0], [0], [1], [0, 0, 1, 1], [], []>} : vector<2x784xbf16>, vector<784x256xbf16>, vector<2x256xf32> -> vector<2x256xf32>
    %c0_3 = arith.constant 0 : index
    %c0_4 = arith.constant 0 : index
    %3 = vector.load %arg3[%c0_3, %c0_4] : memref<1x256xf32, #tpu.memory_space<vmem>>, vector<1x256xf32>
    %4 = vector.broadcast %3 : vector<1x256xf32> to vector<2x256xf32>
    %5 = arith.addf %2, %4 : vector<2x256xf32>
    %cst_5 = arith.constant 0.000000e+00 : f32
    %6 = vector.broadcast %cst_5 : f32 to vector<2x256xf32>
    %7 = arith.maximumf %5, %6 : vector<2x256xf32>
    %8 = arith.truncf %7 : vector<2x256xf32> to vector<2x256xbf16>
    %c0_6 = arith.constant 0 : index
    %c0_7 = arith.constant 0 : index
    %9 = vector.load %arg4[%c0_6, %c0_7] : memref<256x256xbf16, #tpu.memory_space<vmem>>, vector<256x256xbf16>
    %cst_8 = arith.constant dense<0.000000e+00> : vector<2x256xf32>
    %10 = tpu.matmul %8, %9, %cst_8 {dimension_numbers = #tpu.dot_dimension_numbers<[1], [0], [0], [1], [0, 0, 1, 1], [], []>} : vector<2x256xbf16>, vector<256x256xbf16>, vector<2x256xf32> -> vector<2x256xf32>
    %c0_9 = arith.constant 0 : index
    %c0_10 = arith.constant 0 : index
    %11 = vector.load %arg5[%c0_9, %c0_10] : memref<1x256xf32, #tpu.memory_space<vmem>>, vector<1x256xf32>
    %12 = vector.broadcast %11 : vector<1x256xf32> to vector<2x256xf32>
    %13 = arith.addf %10, %12 : vector<2x256xf32>
    %cst_11 = arith.constant 0.000000e+00 : f32
    %14 = vector.broadcast %cst_11 : f32 to vector<2x256xf32>
    %15 = arith.maximumf %13, %14 : vector<2x256xf32>
    %16 = arith.truncf %15 : vector<2x256xf32> to vector<2x256xbf16>
    %c0_12 = arith.constant 0 : index
    %c0_13 = arith.constant 0 : index
    %17 = vector.load %arg6[%c0_12, %c0_13] : memref<256x256xbf16, #tpu.memory_space<vmem>>, vector<256x256xbf16>
    %cst_14 = arith.constant dense<0.000000e+00> : vector<2x256xf32>
    %18 = tpu.matmul %16, %17, %cst_14 {dimension_numbers = #tpu.dot_dimension_numbers<[1], [0], [0], [1], [0, 0, 1, 1], [], []>} : vector<2x256xbf16>, vector<256x256xbf16>, vector<2x256xf32> -> vector<2x256xf32>
    %c0_15 = arith.constant 0 : index
    %c0_16 = arith.constant 0 : index
    %19 = vector.load %arg7[%c0_15, %c0_16] : memref<1x256xf32, #tpu.memory_space<vmem>>, vector<1x256xf32>
    %20 = vector.broadcast %19 : vector<1x256xf32> to vector<2x256xf32>
    %21 = arith.addf %18, %20 : vector<2x256xf32>
    %cst_17 = arith.constant 0.000000e+00 : f32
    %22 = vector.broadcast %cst_17 : f32 to vector<2x256xf32>
    %23 = arith.maximumf %21, %22 : vector<2x256xf32>
    %24 = arith.truncf %23 : vector<2x256xf32> to vector<2x256xbf16>
    %c0_18 = arith.constant 0 : index
    %c0_19 = arith.constant 0 : index
    %25 = vector.load %arg8[%c0_18, %c0_19] : memref<256x128xbf16, #tpu.memory_space<vmem>>, vector<256x128xbf16>
    %cst_20 = arith.constant dense<0.000000e+00> : vector<2x128xf32>
    %26 = tpu.matmul %24, %25, %cst_20 {dimension_numbers = #tpu.dot_dimension_numbers<[1], [0], [0], [1], [0, 0, 1, 1], [], []>} : vector<2x256xbf16>, vector<256x128xbf16>, vector<2x128xf32> -> vector<2x128xf32>
    %c0_21 = arith.constant 0 : index
    %c0_22 = arith.constant 0 : index
    %27 = vector.load %arg9[%c0_21, %c0_22] : memref<1x128xf32, #tpu.memory_space<vmem>>, vector<1x128xf32>
    %28 = vector.broadcast %27 : vector<1x128xf32> to vector<2x128xf32>
    %29 = arith.addf %26, %28 : vector<2x128xf32>
    %cst_23 = arith.constant 0.000000e+00 : f32
    %30 = vector.broadcast %cst_23 : f32 to vector<2x128xf32>
    %31 = arith.maximumf %29, %30 : vector<2x128xf32>
    %32 = arith.truncf %31 : vector<2x128xf32> to vector<2x128xbf16>
    %c0_24 = arith.constant 0 : index
    %c0_25 = arith.constant 0 : index
    %33 = vector.load %arg10[%c0_24, %c0_25] : memref<128x128xbf16, #tpu.memory_space<vmem>>, vector<128x128xbf16>
    %cst_26 = arith.constant dense<0.000000e+00> : vector<2x128xf32>
    %34 = tpu.matmul %32, %33, %cst_26 {dimension_numbers = #tpu.dot_dimension_numbers<[1], [0], [0], [1], [0, 0, 1, 1], [], []>} : vector<2x128xbf16>, vector<128x128xbf16>, vector<2x128xf32> -> vector<2x128xf32>
    %c0_27 = arith.constant 0 : index
    %c0_28 = arith.constant 0 : index
    %35 = vector.load %arg11[%c0_27, %c0_28] : memref<1x128xf32, #tpu.memory_space<vmem>>, vector<1x128xf32>
    %36 = vector.broadcast %35 : vector<1x128xf32> to vector<2x128xf32>
    %37 = arith.addf %34, %36 : vector<2x128xf32>
    %cst_29 = arith.constant 0.000000e+00 : f32
    %38 = vector.broadcast %cst_29 : f32 to vector<2x128xf32>
    %39 = arith.maximumf %37, %38 : vector<2x128xf32>
    %40 = arith.truncf %39 : vector<2x128xf32> to vector<2x128xbf16>
    %c0_30 = arith.constant 0 : index
    %c0_31 = arith.constant 0 : index
    %41 = vector.load %arg12[%c0_30, %c0_31] : memref<128x128xbf16, #tpu.memory_space<vmem>>, vector<128x128xbf16>
    %cst_32 = arith.constant dense<0.000000e+00> : vector<2x128xf32>
    %42 = tpu.matmul %40, %41, %cst_32 {dimension_numbers = #tpu.dot_dimension_numbers<[1], [0], [0], [1], [0, 0, 1, 1], [], []>} : vector<2x128xbf16>, vector<128x128xbf16>, vector<2x128xf32> -> vector<2x128xf32>
    %c0_33 = arith.constant 0 : index
    %c0_34 = arith.constant 0 : index
    %43 = vector.load %arg13[%c0_33, %c0_34] : memref<1x128xf32, #tpu.memory_space<vmem>>, vector<1x128xf32>
    %44 = vector.broadcast %43 : vector<1x128xf32> to vector<2x128xf32>
    %45 = arith.addf %42, %44 : vector<2x128xf32>
    %c0_35 = arith.constant 0 : index
    %c0_36 = arith.constant 0 : index
    %46 = vector.load %arg14[%c0_35, %c0_36] : memref<2x128xf32, #tpu.memory_space<vmem>>, vector<2x128xf32>
    tpu.vector_store %arg14[%c0_35, %c0_36], %45 {strides = array<i32>} : memref<2x128xf32, #tpu.memory_space<vmem>>, vector<2x128xf32>,
    return
  }
  func.func @transform_0(%arg0: i32) -> (i32, i32) {
    %c0_i32 = arith.constant 0 : i32
    %c0_i32_0 = arith.constant 0 : i32
    return %arg0, %c0_i32 : i32, i32
  }
  func.func @transform_1(%arg0: i32) -> (i32, i32) {
    %c0_i32 = arith.constant 0 : i32
    %c0_i32_0 = arith.constant 0 : i32
    %c0_i32_1 = arith.constant 0 : i32
    return %c0_i32, %c0_i32_0 : i32, i32
  }
  func.func @transform_2(%arg0: i32) -> (i32, i32) {
    %c0_i32 = arith.constant 0 : i32
    %c0_i32_0 = arith.constant 0 : i32
    %c0_i32_1 = arith.constant 0 : i32
    return %c0_i32, %c0_i32_0 : i32, i32
  }
  func.func @transform_3(%arg0: i32) -> (i32, i32) {
    %c0_i32 = arith.constant 0 : i32
    %c0_i32_0 = arith.constant 0 : i32
    %c0_i32_1 = arith.constant 0 : i32
    return %c0_i32, %c0_i32_0 : i32, i32
  }
  func.func @transform_4(%arg0: i32) -> (i32, i32) {
    %c0_i32 = arith.constant 0 : i32
    %c0_i32_0 = arith.constant 0 : i32
    %c0_i32_1 = arith.constant 0 : i32
    return %c0_i32, %c0_i32_0 : i32, i32
  }
  func.func @transform_5(%arg0: i32) -> (i32, i32) {
    %c0_i32 = arith.constant 0 : i32
    %c0_i32_0 = arith.constant 0 : i32
    %c0_i32_1 = arith.constant 0 : i32
    return %c0_i32, %c0_i32_0 : i32, i32
  }
  func.func @transform_6(%arg0: i32) -> (i32, i32) {
    %c0_i32 = arith.constant 0 : i32
    %c0_i32_0 = arith.constant 0 : i32
    %c0_i32_1 = arith.constant 0 : i32
    return %c0_i32, %c0_i32_0 : i32, i32
  }
  func.func @transform_7(%arg0: i32) -> (i32, i32) {
    %c0_i32 = arith.constant 0 : i32
    %c0_i32_0 = arith.constant 0 : i32
    %c0_i32_1 = arith.constant 0 : i32
    return %c0_i32, %c0_i32_0 : i32, i32
  }
  func.func @transform_8(%arg0: i32) -> (i32, i32) {
    %c0_i32 = arith.constant 0 : i32
    %c0_i32_0 = arith.constant 0 : i32
    %c0_i32_1 = arith.constant 0 : i32
    return %c0_i32, %c0_i32_0 : i32, i32
  }
  func.func @transform_9(%arg0: i32) -> (i32, i32) {
    %c0_i32 = arith.constant 0 : i32
    %c0_i32_0 = arith.constant 0 : i32
    %c0_i32_1 = arith.constant 0 : i32
    return %c0_i32, %c0_i32_0 : i32, i32
  }
  func.func @transform_10(%arg0: i32) -> (i32, i32) {
    %c0_i32 = arith.constant 0 : i32
    %c0_i32_0 = arith.constant 0 : i32
    %c0_i32_1 = arith.constant 0 : i32
    return %c0_i32, %c0_i32_0 : i32, i32
  }
  func.func @transform_11(%arg0: i32) -> (i32, i32) {
    %c0_i32 = arith.constant 0 : i32
    %c0_i32_0 = arith.constant 0 : i32
    %c0_i32_1 = arith.constant 0 : i32
    return %c0_i32, %c0_i32_0 : i32, i32
  }
  func.func @transform_12(%arg0: i32) -> (i32, i32) {
    %c0_i32 = arith.constant 0 : i32
    %c0_i32_0 = arith.constant 0 : i32
    %c0_i32_1 = arith.constant 0 : i32
    return %c0_i32, %c0_i32_0 : i32, i32
  }
  func.func @transform_13(%arg0: i32) -> (i32, i32) {
    %c0_i32 = arith.constant 0 : i32
    %c0_i32_0 = arith.constant 0 : i32
    return %arg0, %c0_i32 : i32, i32
  }
}

</mosaic_0001>

<llo_original>
// kernel: tpu_custom_call.1
$region0: #{tpu_custom_call.1}
  #allocation0 [shape = 'u32[]', space=smem, size = 0x4, offset = 0x4, fixed_abs, tag = 'smem constant byte address 0x4 - core index']
  #allocation1 [shape = 'u32[144,128]{1,0:T(1,128)}', space=vmem, size = 0x12000, scoped, tag = 'internal scratch']
  %s0 = inlined_call_operand.hbm [shape: bf16[2,784], index: 0, kind: input, shape index: {}]
  %s1 = inlined_call_operand.hbm [shape: bf16[784,256], index: 1, kind: input, shape index: {}]
  %s2 = inlined_call_operand.vmem [shape: f32[1,256], index: 2, kind: input, shape index: {}]
  %s3 = inlined_call_operand.hbm [shape: bf16[256,256], index: 3, kind: input, shape index: {}]
  %s4 = inlined_call_operand.vmem [shape: f32[1,256], index: 4, kind: input, shape index: {}]
  %s5 = inlined_call_operand.hbm [shape: bf16[256,256], index: 5, kind: input, shape index: {}]
  %s6 = inlined_call_operand.vmem [shape: f32[1,256], index: 6, kind: input, shape index: {}]
  %s7 = inlined_call_operand.hbm [shape: bf16[256,128], index: 7, kind: input, shape index: {}]
  %s8 = inlined_call_operand.vmem [shape: f32[1,128], index: 8, kind: input, shape index: {}]
  %s9 = inlined_call_operand.hbm [shape: bf16[128,128], index: 9, kind: input, shape index: {}]
  %s10 = inlined_call_operand.vmem [shape: f32[1,128], index: 10, kind: input, shape index: {}]
  %s11 = inlined_call_operand.hbm [shape: bf16[128,128], index: 11, kind: input, shape index: {}]
  %s12 = inlined_call_operand.vmem [shape: f32[1,128], index: 12, kind: input, shape index: {}]
  %s13 = inlined_call_operand.hbm [shape: f32[2,128], index: 13, kind: output, shape index: {}]
  %s14 = sld [smem:[#allocation0]]
  $region90: #{tpu_custom_call.1} parent=0
    _
  %s16 = ssub.s32 1, %s14
  %s17 = scalar_select 0, %s16, %s14
  $region1: #{tpu_custom_call.1} parent=0
    #allocation2 [shape = 'u8[3584]{0}', space=vmem, size = 0x1000, scoped, tag = 'input window, operand 0, single buffered']
    #allocation3 [shape = 's32[1]{0}', space=sflag, size = 0x4, scoped, tag = 'scoped memory for tpu_custom_call.1']
    #allocation4 [shape = 's32[1]{0}', space=sflag, size = 0x4, scoped, tag = 'scoped memory for tpu_custom_call.1']
    #allocation5 [shape = 'u8[401408]{0}', space=vmem, size = 0x62000, scoped, tag = 'input window, operand 1, single buffered']
    #allocation6 [shape = 's32[1]{0}', space=sflag, size = 0x4, scoped, tag = 'scoped memory for tpu_custom_call.1']
    #allocation7 [shape = 'u8[131072]{0}', space=vmem, size = 0x20000, scoped, tag = 'input window, operand 3, single buffered']
    #allocation8 [shape = 'u8[131072]{0}', space=vmem, size = 0x20000, scoped, tag = 'input window, operand 5, single buffered']
    #allocation9 [shape = 's32[1]{0}', space=sflag, size = 0x4, scoped, tag = 'scoped memory for tpu_custom_call.1']
    #allocation10 [shape = 'u8[65536]{0}', space=vmem, size = 0x10000, scoped, tag = 'input window, operand 7, single buffered']
    #allocation11 [shape = 'u8[32768]{0}', space=vmem, size = 0x8000, scoped, tag = 'input window, operand 9, single buffered']
    #allocation12 [shape = 's32[1]{0}', space=sflag, size = 0x4, scoped, tag = 'scoped memory for tpu_custom_call.1']
    #allocation13 [shape = 'u8[32768]{0}', space=vmem, size = 0x8000, scoped, tag = 'input window, operand 11, single buffered']
    #allocation14 [shape = 'u8[1024]{0}', space=vmem, size = 0x400, scoped, tag = 'output window, operand 0, single buffered']
    %18 = vsyncpa [#allocation3], 0
    %19 = vsyncpa [#allocation6], 0
    %20 = vsyncpa [#allocation9], 0
    %21 = vsyncpa [#allocation12], 0
    %22 = vsyncpa [#allocation4], 0
    // Predicated region
    $region2: #{tpu_custom_call.1} parent=1 // pred_check
      _
    $region3: #{tpu_custom_call.1} parent=1 // pred_check_branch
      %24 = sbr.rel (0) target = $region5
    $region4: #{tpu_custom_call.1} parent=1 // pred_region
      %s26 = ssub.s32 112, 112
      %27 = vsyncadd [#allocation3], %s26
      %s29 = sshll.u32 [#allocation2], 4
      %s30 = int_to_ptr.vmem [resolvable:$true] %s29
      %32 = dma.hbm_to_vmem [thread:$0]  %s0, 112, %s30, [#allocation3]
    $region5: #{tpu_custom_call.1} parent=1 // pred_fallthru
      _
    // Predicated region
    $region6: #{tpu_custom_call.1} parent=1 // pred_check
      _
    $region7: #{tpu_custom_call.1} parent=1 // pred_check_branch
      %34 = sbr.rel (0) target = $region9
    $region8: #{tpu_custom_call.1} parent=1 // pred_region
      %s36 = ssub.s32 12544, 12544
      %37 = vsyncadd [#allocation6], %s36
      %s38 = sshll.u32 [#allocation5], 4
      %s39 = int_to_ptr.vmem [resolvable:$true] %s38
      %44 = dma.hbm_to_vmem [thread:$0]  %s1, 12544, %s39, [#allocation6], 128, 128, 8
    $region9: #{tpu_custom_call.1} parent=1 // pred_fallthru
      _
    // Predicated region
    $region10: #{tpu_custom_call.1} parent=1 // pred_check
      _
    $region11: #{tpu_custom_call.1} parent=1 // pred_check_branch
      %46 = sbr.rel (0) target = $region13
    $region12: #{tpu_custom_call.1} parent=1 // pred_region
      _
    $region13: #{tpu_custom_call.1} parent=1 // pred_fallthru
      _
    // Predicated region
    $region14: #{tpu_custom_call.1} parent=1 // pred_check
      _
    $region15: #{tpu_custom_call.1} parent=1 // pred_check_branch
      %48 = sbr.rel (0) target = $region17
    $region16: #{tpu_custom_call.1} parent=1 // pred_region
      %s50 = ssub.s32 4096, 4096
      %51 = vsyncadd [#allocation6], %s50
      %s52 = sshll.u32 [#allocation7], 4
      %s53 = int_to_ptr.vmem [resolvable:$true] %s52
      %58 = dma.hbm_to_vmem [thread:$0]  %s3, 4096, %s53, [#allocation6], 128, 128, 8
    $region17: #{tpu_custom_call.1} parent=1 // pred_fallthru
      _
    // Predicated region
    $region18: #{tpu_custom_call.1} parent=1 // pred_check
      _
    $region19: #{tpu_custom_call.1} parent=1 // pred_check_branch
      %60 = sbr.rel (0) target = $region21
    $region20: #{tpu_custom_call.1} parent=1 // pred_region
      _
    $region21: #{tpu_custom_call.1} parent=1 // pred_fallthru
      _
    // Predicated region
    $region22: #{tpu_custom_call.1} parent=1 // pred_check
      _
    $region23: #{tpu_custom_call.1} parent=1 // pred_check_branch
      %62 = sbr.rel (0) target = $region25
    $region24: #{tpu_custom_call.1} parent=1 // pred_region
      %s64 = ssub.s32 4096, 4096
      %65 = vsyncadd [#allocation9], %s64
      %s66 = sshll.u32 [#allocation8], 4
      %s67 = int_to_ptr.vmem [resolvable:$true] %s66
      %72 = dma.hbm_to_vmem [thread:$0]  %s5, 4096, %s67, [#allocation9], 128, 128, 8
    $region25: #{tpu_custom_call.1} parent=1 // pred_fallthru
      _
    // Predicated region
    $region26: #{tpu_custom_call.1} parent=1 // pred_check
      _
    $region27: #{tpu_custom_call.1} parent=1 // pred_check_branch
      %74 = sbr.rel (0) target = $region29
    $region28: #{tpu_custom_call.1} parent=1 // pred_region
      _
    $region29: #{tpu_custom_call.1} parent=1 // pred_fallthru
      _
    // Predicated region
    $region30: #{tpu_custom_call.1} parent=1 // pred_check
      _
    $region31: #{tpu_custom_call.1} parent=1 // pred_check_branch
      %76 = sbr.rel (0) target = $region33
    $region32: #{tpu_custom_call.1} parent=1 // pred_region
      %s78 = ssub.s32 2048, 2048
      %79 = vsyncadd [#allocation9], %s78
      %s80 = sshll.u32 [#allocation10], 4
      %s81 = int_to_ptr.vmem [resolvable:$true] %s80
      %86 = dma.hbm_to_vmem [thread:$0]  %s7, 2048, %s81, [#allocation9], 64, 64, 4
    $region33: #{tpu_custom_call.1} parent=1 // pred_fallthru
      _
    // Predicated region
    $region34: #{tpu_custom_call.1} parent=1 // pred_check
      _
    $region35: #{tpu_custom_call.1} parent=1 // pred_check_branch
      %88 = sbr.rel (0) target = $region37
    $region36: #{tpu_custom_call.1} parent=1 // pred_region
      _
    $region37: #{tpu_custom_call.1} parent=1 // pred_fallthru
      _
    // Predicated region
    $region38: #{tpu_custom_call.1} parent=1 // pred_check
      _
    $region39: #{tpu_custom_call.1} parent=1 // pred_check_branch
      %90 = sbr.rel (0) target = $region41
    $region40: #{tpu_custom_call.1} parent=1 // pred_region
      %s92 = ssub.s32 1024, 1024
      %93 = vsyncadd [#allocation12], %s92
      %s94 = sshll.u32 [#allocation11], 4
      %s95 = int_to_ptr.vmem [resolvable:$true] %s94
      %100 = dma.hbm_to_vmem [thread:$0]  %s9, 1024, %s95, [#allocation12], 64, 64, 4
    $region41: #{tpu_custom_call.1} parent=1 // pred_fallthru
      _
    // Predicated region
    $region42: #{tpu_custom_call.1} parent=1 // pred_check
      _
    $region43: #{tpu_custom_call.1} parent=1 // pred_check_branch
      %102 = sbr.rel (0) target = $region45
    $region44: #{tpu_custom_call.1} parent=1 // pred_region
      _
    $region45: #{tpu_custom_call.1} parent=1 // pred_fallthru
      _
    // Predicated region
    $region46: #{tpu_custom_call.1} parent=1 // pred_check
      _
    $region47: #{tpu_custom_call.1} parent=1 // pred_check_branch
      %104 = sbr.rel (0) target = $region49
    $region48: #{tpu_custom_call.1} parent=1 // pred_region
      %s106 = ssub.s32 1024, 1024
      %107 = vsyncadd [#allocation12], %s106
      %s108 = sshll.u32 [#allocation13], 4
      %s109 = int_to_ptr.vmem [resolvable:$true] %s108
      %114 = dma.hbm_to_vmem [thread:$0]  %s11, 1024, %s109, [#allocation12], 64, 64, 4
    $region49: #{tpu_custom_call.1} parent=1 // pred_fallthru
      _
    // Predicated region
    $region50: #{tpu_custom_call.1} parent=1 // pred_check
      _
    $region51: #{tpu_custom_call.1} parent=1 // pred_check_branch
      %116 = sbr.rel (0) target = $region53
    $region52: #{tpu_custom_call.1} parent=1 // pred_region
      _
    $region53: #{tpu_custom_call.1} parent=1 // pred_fallthru
      _
    // Predicated region
    $region54: #{tpu_custom_call.1} parent=1 // pred_check
      _
    $region55: #{tpu_custom_call.1} parent=1 // pred_check_branch
      %118 = sbr.rel (0) target = $region57
    $region56: #{tpu_custom_call.1} parent=1 // pred_region
      %119 = dma.done [#allocation3], 112
    $region57: #{tpu_custom_call.1} parent=1 // pred_fallthru
      _
    // Predicated region
    $region58: #{tpu_custom_call.1} parent=1 // pred_check
      _
    $region59: #{tpu_custom_call.1} parent=1 // pred_check_branch
      %121 = sbr.rel (0) target = $region61
    $region60: #{tpu_custom_call.1} parent=1 // pred_region
      %122 = dma.done [#allocation6], 12544
    $region61: #{tpu_custom_call.1} parent=1 // pred_fallthru
      _
    // Predicated region
    $region62: #{tpu_custom_call.1} parent=1 // pred_check
      _
    $region63: #{tpu_custom_call.1} parent=1 // pred_check_branch
      %124 = sbr.rel (0) target = $region65
    $region64: #{tpu_custom_call.1} parent=1 // pred_region
      %125 = dma.done [#allocation6], 4096
    $region65: #{tpu_custom_call.1} parent=1 // pred_fallthru
      _
    // Predicated region
    $region66: #{tpu_custom_call.1} parent=1 // pred_check
      _
    $region67: #{tpu_custom_call.1} parent=1 // pred_check_branch
      %127 = sbr.rel (0) target = $region69
    $region68: #{tpu_custom_call.1} parent=1 // pred_region
      %128 = dma.done [#allocation9], 4096
    $region69: #{tpu_custom_call.1} parent=1 // pred_fallthru
      _
    // Predicated region
    $region70: #{tpu_custom_call.1} parent=1 // pred_check
      _
    $region71: #{tpu_custom_call.1} parent=1 // pred_check_branch
      %130 = sbr.rel (0) target = $region73
    $region72: #{tpu_custom_call.1} parent=1 // pred_region
      %131 = dma.done [#allocation9], 2048
    $region73: #{tpu_custom_call.1} parent=1 // pred_fallthru
      _
    // Predicated region
    $region74: #{tpu_custom_call.1} parent=1 // pred_check
      _
    $region75: #{tpu_custom_call.1} parent=1 // pred_check_branch
      %133 = sbr.rel (0) target = $region77
    $region76: #{tpu_custom_call.1} parent=1 // pred_region
      %134 = dma.done [#allocation12], 1024
    $region77: #{tpu_custom_call.1} parent=1 // pred_fallthru
      _
    // Predicated region
    $region78: #{tpu_custom_call.1} parent=1 // pred_check
      _
    $region79: #{tpu_custom_call.1} parent=1 // pred_check_branch
      %136 = sbr.rel (0) target = $region81
    $region80: #{tpu_custom_call.1} parent=1 // pred_region
      %137 = dma.done [#allocation12], 1024
    $region81: #{tpu_custom_call.1} parent=1 // pred_fallthru
      _
    %v139 = vld [vmem:[#allocation2] sm:$0x7f]
    %v140 = vld [vmem:[#allocation5] sm:$0xff]
    %v141 = vld [vmem:[#allocation5 + $0x8] sm:$0xff]
    %v142 = vld [vmem:[#allocation5 + $0x10] sm:$0xff]
    %v143 = vld [vmem:[#allocation5 + $0x18] sm:$0xff]
    %v144 = vld [vmem:[#allocation5 + $0x20] sm:$0xff]
    %v145 = vld [vmem:[#allocation5 + $0x28] sm:$0xff]
    %v146 = vld [vmem:[#allocation5 + $0x30] sm:$0xff]
    %v147 = vld [vmem:[#allocation5 + $0x38] sm:$0xff]
    %v148 = vld [vmem:[#allocation5 + $0x40] sm:$0xff]
    %v149 = vld [vmem:[#allocation5 + $0x48] sm:$0xff]
    %v150 = vld [vmem:[#allocation5 + $0x50] sm:$0xff]
    %v151 = vld [vmem:[#allocation5 + $0x58] sm:$0xff]
    %v152 = vld [vmem:[#allocation5 + $0x60] sm:$0xff]
    %v153 = vld [vmem:[#allocation5 + $0x68] sm:$0xff]
    %v154 = vld [vmem:[#allocation5 + $0x70] sm:$0xff]
    %v155 = vld [vmem:[#allocation5 + $0x78] sm:$0xff]
    %v156 = vld [vmem:[#allocation5 + $0x80] sm:$0xff]
    %v157 = vld [vmem:[#allocation5 + $0x88] sm:$0xff]
    %v158 = vld [vmem:[#allocation5 + $0x90] sm:$0xff]
    %v159 = vld [vmem:[#allocation5 + $0x98] sm:$0xff]
    %v160 = vld [vmem:[#allocation5 + $0xa0] sm:$0xff]
    %v161 = vld [vmem:[#allocation5 + $0xa8] sm:$0xff]
    %v162 = vld [vmem:[#allocation5 + $0xb0] sm:$0xff]
    %v163 = vld [vmem:[#allocation5 + $0xb8] sm:$0xff]
    %v164 = vld [vmem:[#allocation5 + $0xc0] sm:$0xff]
    %v165 = vld [vmem:[#allocation5 + $0xc8] sm:$0xff]
    %v166 = vld [vmem:[#allocation5 + $0xd0] sm:$0xff]
    %v167 = vld [vmem:[#allocation5 + $0xd8] sm:$0xff]
    %v168 = vld [vmem:[#allocation5 + $0xe0] sm:$0xff]
    %v169 = vld [vmem:[#allocation5 + $0xe8] sm:$0xff]
    %v170 = vld [vmem:[#allocation5 + $0xf0] sm:$0xff]
    %v171 = vld [vmem:[#allocation5 + $0xf8] sm:$0xff]
    %v172 = vld [vmem:[#allocation5 + $0x100] sm:$0xff]
    %v173 = vld [vmem:[#allocation5 + $0x108] sm:$0xff]
    %v174 = vld [vmem:[#allocation5 + $0x110] sm:$0xff]
    %v175 = vld [vmem:[#allocation5 + $0x118] sm:$0xff]
    %v176 = vld [vmem:[#allocation5 + $0x120] sm:$0xff]
    %v177 = vld [vmem:[#allocation5 + $0x128] sm:$0xff]
    %v178 = vld [vmem:[#allocation5 + $0x130] sm:$0xff]
    %v179 = vld [vmem:[#allocation5 + $0x138] sm:$0xff]
    %v180 = vld [vmem:[#allocation5 + $0x140] sm:$0xff]
    %v181 = vld [vmem:[#allocation5 + $0x148] sm:$0xff]
    %v182 = vld [vmem:[#allocation5 + $0x150] sm:$0xff]
    %v183 = vld [vmem:[#allocation5 + $0x158] sm:$0xff]
    %v184 = vld [vmem:[#allocation5 + $0x160] sm:$0xff]
    %v185 = vld [vmem:[#allocation5 + $0x168] sm:$0xff]
    %v186 = vld [vmem:[#allocation5 + $0x170] sm:$0xff]
    %v187 = vld [vmem:[#allocation5 + $0x178] sm:$0xff]
    %v188 = vld [vmem:[#allocation5 + $0x180] sm:$0xff]
    %v189 = vld [vmem:[#allocation5 + $0x188] sm:$0xff]
    %v190 = vld [vmem:[#allocation5 + $0x190] sm:$0xff]
    %v191 = vld [vmem:[#allocation5 + $0x198] sm:$0xff]
    %v192 = vld [vmem:[#allocation5 + $0x1a0] sm:$0xff]
    %v193 = vld [vmem:[#allocation5 + $0x1a8] sm:$0xff]
    %v194 = vld [vmem:[#allocation5 + $0x1b0] sm:$0xff]
    %v195 = vld [vmem:[#allocation5 + $0x1b8] sm:$0xff]
    %v196 = vld [vmem:[#allocation5 + $0x1c0] sm:$0xff]
    %v197 = vld [vmem:[#allocation5 + $0x1c8] sm:$0xff]
    %v198 = vld [vmem:[#allocation5 + $0x1d0] sm:$0xff]
    %v199 = vld [vmem:[#allocation5 + $0x1d8] sm:$0xff]
    %v200 = vld [vmem:[#allocation5 + $0x1e0] sm:$0xff]
    %v201 = vld [vmem:[#allocation5 + $0x1e8] sm:$0xff]
    %v202 = vld [vmem:[#allocation5 + $0x1f0] sm:$0xff]
    %v203 = vld [vmem:[#allocation5 + $0x1f8] sm:$0xff]
    %v204 = vld [vmem:[#allocation5 + $0x200] sm:$0xff]
    %v205 = vld [vmem:[#allocation5 + $0x208] sm:$0xff]
    %v206 = vld [vmem:[#allocation5 + $0x210] sm:$0xff]
    %v207 = vld [vmem:[#allocation5 + $0x218] sm:$0xff]
    %v208 = vld [vmem:[#allocation5 + $0x220] sm:$0xff]
    %v209 = vld [vmem:[#allocation5 + $0x228] sm:$0xff]
    %v210 = vld [vmem:[#allocation5 + $0x230] sm:$0xff]
    %v211 = vld [vmem:[#allocation5 + $0x238] sm:$0xff]
    %v212 = vld [vmem:[#allocation5 + $0x240] sm:$0xff]
    %v213 = vld [vmem:[#allocation5 + $0x248] sm:$0xff]
    %v214 = vld [vmem:[#allocation5 + $0x250] sm:$0xff]
    %v215 = vld [vmem:[#allocation5 + $0x258] sm:$0xff]
    %v216 = vld [vmem:[#allocation5 + $0x260] sm:$0xff]
    %v217 = vld [vmem:[#allocation5 + $0x268] sm:$0xff]
    %v218 = vld [vmem:[#allocation5 + $0x270] sm:$0xff]
    %v219 = vld [vmem:[#allocation5 + $0x278] sm:$0xff]
    %v220 = vld [vmem:[#allocation5 + $0x280] sm:$0xff]
    %v221 = vld [vmem:[#allocation5 + $0x288] sm:$0xff]
    %v222 = vld [vmem:[#allocation5 + $0x290] sm:$0xff]
    %v223 = vld [vmem:[#allocation5 + $0x298] sm:$0xff]
    %v224 = vld [vmem:[#allocation5 + $0x2a0] sm:$0xff]
    %v225 = vld [vmem:[#allocation5 + $0x2a8] sm:$0xff]
    %v226 = vld [vmem:[#allocation5 + $0x2b0] sm:$0xff]
    %v227 = vld [vmem:[#allocation5 + $0x2b8] sm:$0xff]
    %v228 = vld [vmem:[#allocation5 + $0x2c0] sm:$0xff]
    %v229 = vld [vmem:[#allocation5 + $0x2c8] sm:$0xff]
    %v230 = vld [vmem:[#allocation5 + $0x2d0] sm:$0xff]
    %v231 = vld [vmem:[#allocation5 + $0x2d8] sm:$0xff]
    %v232 = vld [vmem:[#allocation5 + $0x2e0] sm:$0xff]
    %v233 = vld [vmem:[#allocation5 + $0x2e8] sm:$0xff]
    %v234 = vld [vmem:[#allocation5 + $0x2f0] sm:$0xff]
    %v235 = vld [vmem:[#allocation5 + $0x2f8] sm:$0xff]
    %v236 = vld [vmem:[#allocation5 + $0x300] sm:$0xff]
    %v237 = vld [vmem:[#allocation5 + $0x308] sm:$0xff]
    %v238 = vld [vmem:[%s2] sm:$0x3]
    %v240 = vlaneseq
    %v241 = vshrl.u32 %v240, 7
    %v242 = vsub.s32 0, %v241
    %v243 = vrot.slane %v238, %v242
    %v244 = vlaneseq
    %v245 = vshrl.u32 %v244, 7
    %v246 = vsub.s32 1, %v245
    %v247 = vrot.slane %v238, %v246
    %v251 = vcombine.high %v139, %v139
    %v253 = vunpack.c.l.s4 1966171168
    %v254 = vunpack.c.0.s8 %v253
    %v255 = vlaneseq
    %v256 = vshrl.u32 %v255, 7
    %v257 = vsub.s32 %v254, %v256
    %v258 = vrot.slane %v139, %v257
    %v260 = vunpack.c.l.s4 1966171168
    %v261 = vunpack.c.0.s8 %v260
    %v262 = vlaneseq
    %v263 = vshrl.u32 %v262, 7
    %v264 = vsub.s32 %v261, %v263
    %v265 = vrot.slane %v251, %v264
    %v266 = vcombine.high %v258, %v258
    %v267 = vcombine.high %v265, %v265
    %v269 = vunpack.c.l.s4 1966171168
    %v270 = vunpack.c.0.s8 %v269
    %v271 = vlaneseq
    %v272 = vshrl.u32 %v271, 7
    %v273 = vsub.s32 %v270, %v272
    %v274 = vrot.slane %v258, %v273
    %v276 = vunpack.c.l.s4 1966171168
    %v277 = vunpack.c.0.s8 %v276
    %v278 = vlaneseq
    %v279 = vshrl.u32 %v278, 7
    %v280 = vsub.s32 %v277, %v279
    %v281 = vrot.slane %v265, %v280
    %v283 = vunpack.c.l.s4 1966171168
    %v284 = vunpack.c.0.s8 %v283
    %v285 = vlaneseq
    %v286 = vshrl.u32 %v285, 7
    %v287 = vsub.s32 %v284, %v286
    %v288 = vrot.slane %v266, %v287
    %v290 = vunpack.c.l.s4 1966171168
    %v291 = vunpack.c.0.s8 %v290
    %v292 = vlaneseq
    %v293 = vshrl.u32 %v292, 7
    %v294 = vsub.s32 %v291, %v293
    %v295 = vrot.slane %v267, %v294
    %v296 = vcombine.high %v274, %v274
    %v297 = vcombine.high %v281, %v281
    %v298 = vcombine.high %v288, %v288
    %v403 = vunpack.c.l.b16 %v140
    %v404 = vunpack.c.h.b16 %v140
    %v405 = vunpack.c.l.b16 %v141
    %v406 = vunpack.c.h.b16 %v141
    %v407 = vunpack.c.l.b16 %v142
    %v408 = vunpack.c.h.b16 %v142
    %v409 = vunpack.c.l.b16 %v143
    %v410 = vunpack.c.h.b16 %v143
    %v411 = vunpack.c.l.b16 %v144
    %v412 = vunpack.c.h.b16 %v144
    %v413 = vunpack.c.l.b16 %v145
    %v414 = vunpack.c.h.b16 %v145
    %v415 = vunpack.c.l.b16 %v146
    %v416 = vunpack.c.h.b16 %v146
    %v417 = vunpack.c.l.b16 %v147
    %v418 = vunpack.c.h.b16 %v147
    %v419 = vunpack.c.l.b16 %v148
    %v420 = vunpack.c.h.b16 %v148
    %v421 = vunpack.c.l.b16 %v149
    %v422 = vunpack.c.h.b16 %v149
    %v423 = vunpack.c.l.b16 %v150
    %v424 = vunpack.c.h.b16 %v150
    %v425 = vunpack.c.l.b16 %v151
    %v426 = vunpack.c.h.b16 %v151
    %v427 = vunpack.c.l.b16 %v152
    %v428 = vunpack.c.h.b16 %v152
    %v429 = vunpack.c.l.b16 %v153
    %v430 = vunpack.c.h.b16 %v153
    %v431 = vunpack.c.l.b16 %v154
    %v432 = vunpack.c.h.b16 %v154
    %v433 = vunpack.c.l.b16 %v155
    %v434 = vunpack.c.h.b16 %v155
    %v435 = vunpack.c.l.b16 %v156
    %v436 = vunpack.c.h.b16 %v156
    %v437 = vunpack.c.l.b16 %v157
    %v438 = vunpack.c.h.b16 %v157
    %v439 = vunpack.c.l.b16 %v158
    %v440 = vunpack.c.h.b16 %v158
    %v441 = vunpack.c.l.b16 %v159
    %v442 = vunpack.c.h.b16 %v159
    %v443 = vunpack.c.l.b16 %v160
    %v444 = vunpack.c.h.b16 %v160
    %v445 = vunpack.c.l.b16 %v161
    %v446 = vunpack.c.h.b16 %v161
    %v447 = vunpack.c.l.b16 %v162
    %v448 = vunpack.c.h.b16 %v162
    %v449 = vunpack.c.l.b16 %v163
    %v450 = vunpack.c.h.b16 %v163
    %v451 = vunpack.c.l.b16 %v164
    %v452 = vunpack.c.h.b16 %v164
    %v453 = vunpack.c.l.b16 %v165
    %v454 = vunpack.c.h.b16 %v165
    %v455 = vunpack.c.l.b16 %v166
    %v456 = vunpack.c.h.b16 %v166
    %v457 = vunpack.c.l.b16 %v167
    %v458 = vunpack.c.h.b16 %v167
    %v459 = vunpack.c.l.b16 %v168
    %v460 = vunpack.c.h.b16 %v168
    %v461 = vunpack.c.l.b16 %v169
    %v462 = vunpack.c.h.b16 %v169
    %v463 = vunpack.c.l.b16 %v170
    %v464 = vunpack.c.h.b16 %v170
    %v465 = vunpack.c.l.b16 %v171
    %v466 = vunpack.c.h.b16 %v171
    %v467 = vunpack.c.l.b16 %v172
    %v468 = vunpack.c.h.b16 %v172
    %v469 = vunpack.c.l.b16 %v173
    %v470 = vunpack.c.h.b16 %v173
    %v471 = vunpack.c.l.b16 %v174
    %v472 = vunpack.c.h.b16 %v174
    %v473 = vunpack.c.l.b16 %v175
    %v474 = vunpack.c.h.b16 %v175
    %v475 = vunpack.c.l.b16 %v176
    %v476 = vunpack.c.h.b16 %v176
    %v477 = vunpack.c.l.b16 %v177
    %v478 = vunpack.c.h.b16 %v177
    %v479 = vunpack.c.l.b16 %v178
    %v480 = vunpack.c.h.b16 %v178
    %v481 = vunpack.c.l.b16 %v179
    %v482 = vunpack.c.h.b16 %v179
    %v483 = vunpack.c.l.b16 %v180
    %v484 = vunpack.c.h.b16 %v180
    %v485 = vunpack.c.l.b16 %v181
    %v486 = vunpack.c.h.b16 %v181
    %v487 = vunpack.c.l.b16 %v182
    %v488 = vunpack.c.h.b16 %v182
    %v489 = vunpack.c.l.b16 %v183
    %v490 = vunpack.c.h.b16 %v183
    %v491 = vunpack.c.l.b16 %v184
    %v492 = vunpack.c.h.b16 %v184
    %v493 = vunpack.c.l.b16 %v185
    %v494 = vunpack.c.h.b16 %v185
    %v495 = vunpack.c.l.b16 %v186
    %v496 = vunpack.c.h.b16 %v186
    %v497 = vunpack.c.l.b16 %v187
    %v498 = vunpack.c.h.b16 %v187
    %v499 = vunpack.c.l.b16 %v188
    %v500 = vunpack.c.h.b16 %v188
    %v501 = vunpack.c.l.b16 %v189
    %v502 = vunpack.c.h.b16 %v189
    %v503 = vunpack.c.l.b16 %v190
    %v504 = vunpack.c.h.b16 %v190
    %v505 = vunpack.c.l.b16 %v191
    %v506 = vunpack.c.h.b16 %v191
    %v507 = vunpack.c.l.b16 %v192
    %v508 = vunpack.c.h.b16 %v192
    %v509 = vunpack.c.l.b16 %v193
    %v510 = vunpack.c.h.b16 %v193
    %v511 = vunpack.c.l.b16 %v194
    %v512 = vunpack.c.h.b16 %v194
    %v513 = vunpack.c.l.b16 %v195
    %v514 = vunpack.c.h.b16 %v195
    %v515 = vunpack.c.l.b16 %v196
    %v516 = vunpack.c.h.b16 %v196
    %v517 = vunpack.c.l.b16 %v197
    %v518 = vunpack.c.h.b16 %v197
    %v519 = vunpack.c.l.b16 %v198
    %v520 = vunpack.c.h.b16 %v198
    %v521 = vunpack.c.l.b16 %v199
    %v522 = vunpack.c.h.b16 %v199
    %v523 = vunpack.c.l.b16 %v200
    %v524 = vunpack.c.h.b16 %v200
    %v525 = vunpack.c.l.b16 %v201
    %v526 = vunpack.c.h.b16 %v201
    %v527 = vunpack.c.l.b16 %v202
    %v528 = vunpack.c.h.b16 %v202
    %v529 = vunpack.c.l.b16 %v203
    %v530 = vunpack.c.h.b16 %v203
    %v531 = vunpack.c.l.b16 %v204
    %v532 = vunpack.c.h.b16 %v204
    %v533 = vunpack.c.l.b16 %v205
    %v534 = vunpack.c.h.b16 %v205
    %v535 = vunpack.c.l.b16 %v206
    %v536 = vunpack.c.h.b16 %v206
    %v537 = vunpack.c.l.b16 %v207
    %v538 = vunpack.c.h.b16 %v207
    %v539 = vunpack.c.l.b16 %v208
    %v540 = vunpack.c.h.b16 %v208
    %v541 = vunpack.c.l.b16 %v209
    %v542 = vunpack.c.h.b16 %v209
    %v543 = vunpack.c.l.b16 %v210
    %v544 = vunpack.c.h.b16 %v210
    %v545 = vunpack.c.l.b16 %v211
    %v546 = vunpack.c.h.b16 %v211
    %v547 = vunpack.c.l.b16 %v212
    %v548 = vunpack.c.h.b16 %v212
    %v549 = vunpack.c.l.b16 %v213
    %v550 = vunpack.c.h.b16 %v213
    %v551 = vunpack.c.l.b16 %v214
    %v552 = vunpack.c.h.b16 %v214
    %v553 = vunpack.c.l.b16 %v215
    %v554 = vunpack.c.h.b16 %v215
    %v555 = vunpack.c.l.b16 %v216
    %v556 = vunpack.c.h.b16 %v216
    %v557 = vunpack.c.l.b16 %v217
    %v558 = vunpack.c.h.b16 %v217
    %v559 = vunpack.c.l.b16 %v218
    %v560 = vunpack.c.h.b16 %v218
    %v561 = vunpack.c.l.b16 %v219
    %v562 = vunpack.c.h.b16 %v219
    %v563 = vunpack.c.l.b16 %v220
    %v564 = vunpack.c.h.b16 %v220
    %v565 = vunpack.c.l.b16 %v221
    %v566 = vunpack.c.h.b16 %v221
    %v567 = vunpack.c.l.b16 %v222
    %v568 = vunpack.c.h.b16 %v222
    %v569 = vunpack.c.l.b16 %v223
    %v570 = vunpack.c.h.b16 %v223
    %v571 = vunpack.c.l.b16 %v224
    %v572 = vunpack.c.h.b16 %v224
    %v573 = vunpack.c.l.b16 %v225
    %v574 = vunpack.c.h.b16 %v225
    %v575 = vunpack.c.l.b16 %v226
    %v576 = vunpack.c.h.b16 %v226
    %v577 = vunpack.c.l.b16 %v227
    %v578 = vunpack.c.h.b16 %v227
    %v579 = vunpack.c.l.b16 %v228
    %v580 = vunpack.c.h.b16 %v228
    %v581 = vunpack.c.l.b16 %v229
    %v582 = vunpack.c.h.b16 %v229
    %v583 = vunpack.c.l.b16 %v230
    %v584 = vunpack.c.h.b16 %v230
    %v585 = vunpack.c.l.b16 %v231
    %v586 = vunpack.c.h.b16 %v231
    %v587 = vunpack.c.l.b16 %v232
    %v588 = vunpack.c.h.b16 %v232
    %v589 = vunpack.c.l.b16 %v233
    %v590 = vunpack.c.h.b16 %v233
    %v591 = vunpack.c.l.b16 %v234
    %v592 = vunpack.c.h.b16 %v234
    %v593 = vunpack.c.l.b16 %v235
    %v594 = vunpack.c.h.b16 %v235
    %v595 = vunpack.c.l.b16 %v236
    %v596 = vunpack.c.h.b16 %v236
    %v597 = vunpack.c.l.b16 %v237
    %v598 = vunpack.c.h.b16 %v237
    %v599 = vpack.c.b16 %v405, %v403
    %v600 = vpack.c.b16 %v406, %v404
    %v601 = vpack.c.b16 %v409, %v407
    %v602 = vpack.c.b16 %v410, %v408
    %v603 = vpack.c.b16 %v413, %v411
    %v604 = vpack.c.b16 %v414, %v412
    %v605 = vpack.c.b16 %v417, %v415
    %v606 = vpack.c.b16 %v418, %v416
    %v607 = vpack.c.b16 %v421, %v419
    %v608 = vpack.c.b16 %v422, %v420
    %v609 = vpack.c.b16 %v425, %v423
    %v610 = vpack.c.b16 %v426, %v424
    %v611 = vpack.c.b16 %v429, %v427
    %v612 = vpack.c.b16 %v430, %v428
    %v613 = vpack.c.b16 %v433, %v431
    %v614 = vpack.c.b16 %v434, %v432
    %v615 = vpack.c.b16 %v437, %v435
    %v616 = vpack.c.b16 %v438, %v436
    %v617 = vpack.c.b16 %v441, %v439
    %v618 = vpack.c.b16 %v442, %v440
    %v619 = vpack.c.b16 %v445, %v443
    %v620 = vpack.c.b16 %v446, %v444
    %v621 = vpack.c.b16 %v449, %v447
    %v622 = vpack.c.b16 %v450, %v448
    %v623 = vpack.c.b16 %v453, %v451
    %v624 = vpack.c.b16 %v454, %v452
    %v625 = vpack.c.b16 %v457, %v455
    %v626 = vpack.c.b16 %v458, %v456
    %v627 = vpack.c.b16 %v461, %v459
    %v628 = vpack.c.b16 %v462, %v460
    %v629 = vpack.c.b16 %v465, %v463
    %v630 = vpack.c.b16 %v466, %v464
    %v631 = vpack.c.b16 %v469, %v467
    %v632 = vpack.c.b16 %v470, %v468
    %v633 = vpack.c.b16 %v473, %v471
    %v634 = vpack.c.b16 %v474, %v472
    %v635 = vpack.c.b16 %v477, %v475
    %v636 = vpack.c.b16 %v478, %v476
    %v637 = vpack.c.b16 %v481, %v479
    %v638 = vpack.c.b16 %v482, %v480
    %v639 = vpack.c.b16 %v485, %v483
    %v640 = vpack.c.b16 %v486, %v484
    %v641 = vpack.c.b16 %v489, %v487
    %v642 = vpack.c.b16 %v490, %v488
    %v643 = vpack.c.b16 %v493, %v491
    %v644 = vpack.c.b16 %v494, %v492
    %v645 = vpack.c.b16 %v497, %v495
    %v646 = vpack.c.b16 %v498, %v496
    %v647 = vpack.c.b16 %v501, %v499
    %v648 = vpack.c.b16 %v502, %v500
    %v649 = vpack.c.b16 %v505, %v503
    %v650 = vpack.c.b16 %v506, %v504
    %v651 = vpack.c.b16 %v509, %v507
    %v652 = vpack.c.b16 %v510, %v508
    %v653 = vpack.c.b16 %v513, %v511
    %v654 = vpack.c.b16 %v514, %v512
    %v655 = vpack.c.b16 %v517, %v515
    %v656 = vpack.c.b16 %v518, %v516
    %v657 = vpack.c.b16 %v521, %v519
    %v658 = vpack.c.b16 %v522, %v520
    %v659 = vpack.c.b16 %v525, %v523
    %v660 = vpack.c.b16 %v526, %v524
    %v661 = vpack.c.b16 %v529, %v527
    %v662 = vpack.c.b16 %v530, %v528
    %v663 = vpack.c.b16 %v533, %v531
    %v664 = vpack.c.b16 %v534, %v532
    %v665 = vpack.c.b16 %v537, %v535
    %v666 = vpack.c.b16 %v538, %v536
    %v667 = vpack.c.b16 %v541, %v539
    %v668 = vpack.c.b16 %v542, %v540
    %v669 = vpack.c.b16 %v545, %v543
    %v670 = vpack.c.b16 %v546, %v544
    %v671 = vpack.c.b16 %v549, %v547
    %v672 = vpack.c.b16 %v550, %v548
    %v673 = vpack.c.b16 %v553, %v551
    %v674 = vpack.c.b16 %v554, %v552
    %v675 = vpack.c.b16 %v557, %v555
    %v676 = vpack.c.b16 %v558, %v556
    %v677 = vpack.c.b16 %v561, %v559
    %v678 = vpack.c.b16 %v562, %v560
    %v679 = vpack.c.b16 %v565, %v563
    %v680 = vpack.c.b16 %v566, %v564
    %v681 = vpack.c.b16 %v569, %v567
    %v682 = vpack.c.b16 %v570, %v568
    %v683 = vpack.c.b16 %v573, %v571
    %v684 = vpack.c.b16 %v574, %v572
    %v685 = vpack.c.b16 %v577, %v575
    %v686 = vpack.c.b16 %v578, %v576
    %v687 = vpack.c.b16 %v581, %v579
    %v688 = vpack.c.b16 %v582, %v580
    %v689 = vpack.c.b16 %v585, %v583
    %v690 = vpack.c.b16 %v586, %v584
    %v691 = vpack.c.b16 %v589, %v587
    %v692 = vpack.c.b16 %v590, %v588
    %v693 = vpack.c.b16 %v593, %v591
    %v694 = vpack.c.b16 %v594, %v592
    %v695 = vpack.c.b16 %v597, %v595
    %v696 = vpack.c.b16 %v598, %v596
    %vm795 = vcmask 130048
    %v797 = vsel %vm795, %v297, 0
    %799 = vmatprep.subr.bf16.mxu0 %v600
    %800 = vmatpush1.bf16.msra.mxu0 %v599
    %801 = vmatprep.subr.bf16.mxu0 %v602
    %802 = vmatpush1.bf16.msra.mxu0 %v601
    %803 = vmatprep.subr.bf16.mxu0 %v604
    %804 = vmatpush1.bf16.msra.mxu0 %v603
    %805 = vmatprep.subr.bf16.mxu0 %v606
    %806 = vmatpush1.bf16.msra.mxu0 %v605
    %807 = vmatprep.subr.bf16.mxu0 %v608
    %808 = vmatpush1.bf16.msra.mxu0 %v607
    %809 = vmatprep.subr.bf16.mxu0 %v610
    %810 = vmatpush1.bf16.msra.mxu0 %v609
    %811 = vmatprep.subr.bf16.mxu0 %v612
    %812 = vmatpush1.bf16.msra.mxu0 %v611
    %813 = vmatprep.subr.bf16.mxu0 %v614
    %814 = vmatpush1.bf16.msra.mxu0 %v613
    %815 = vmatprep.subr.bf16.mxu0 %v616
    %816 = vmatpush1.bf16.msra.mxu0 %v615
    %817 = vmatprep.subr.bf16.mxu0 %v618
    %818 = vmatpush1.bf16.msra.mxu0 %v617
    %819 = vmatprep.subr.bf16.mxu0 %v620
    %820 = vmatpush1.bf16.msra.mxu0 %v619
    %821 = vmatprep.subr.bf16.mxu0 %v622
    %822 = vmatpush1.bf16.msra.mxu0 %v621
    %823 = vmatprep.subr.bf16.mxu0 %v624
    %824 = vmatpush1.bf16.msra.mxu0 %v623
    %825 = vmatprep.subr.bf16.mxu0 %v626
    %826 = vmatpush1.bf16.msra.mxu0 %v625
    %827 = vmatprep.subr.bf16.mxu0 %v628
    %828 = vmatpush1.bf16.msra.mxu0 %v627
    %829 = vmatprep.subr.bf16.mxu0 %v630
    %830 = vmatpush1.bf16.msra.mxu0 %v629
    %831 = vmatprep.mubr.bf16.mxu0 %v288
    %832 = vmatmul.mubr.bf16.gmra.mrb[0].mxu0 %v274
    %v833 = vpop.f32.mrb[0].mxu0
    %v834 = vadd.f32 %v243, %v833
    %v835 = vpop.f32.mrb[0].mxu0
    %v836 = vadd.f32 %v247, %v835
    %v837 = vpop.f32.mrb[0].mxu0
    %v838 = vpop.f32.mrb[0].mxu0
    %839 = vdwg.mxu0
    %840 = vmatprep.subr.bf16.mxu0 %v632
    %841 = vmatpush1.bf16.msra.mxu0 %v631
    %842 = vmatprep.subr.bf16.mxu0 %v634
    %843 = vmatpush1.bf16.msra.mxu0 %v633
    %844 = vmatprep.subr.bf16.mxu0 %v636
    %845 = vmatpush1.bf16.msra.mxu0 %v635
    %846 = vmatprep.subr.bf16.mxu0 %v638
    %847 = vmatpush1.bf16.msra.mxu0 %v637
    %848 = vmatprep.subr.bf16.mxu0 %v640
    %849 = vmatpush1.bf16.msra.mxu0 %v639
    %850 = vmatprep.subr.bf16.mxu0 %v642
    %851 = vmatpush1.bf16.msra.mxu0 %v641
    %852 = vmatprep.subr.bf16.mxu0 %v644
    %853 = vmatpush1.bf16.msra.mxu0 %v643
    %854 = vmatprep.subr.bf16.mxu0 %v646
    %855 = vmatpush1.bf16.msra.mxu0 %v645
    %856 = vmatprep.subr.bf16.mxu0 %v648
    %857 = vmatpush1.bf16.msra.mxu0 %v647
    %858 = vmatprep.subr.bf16.mxu0 %v650
    %859 = vmatpush1.bf16.msra.mxu0 %v649
    %860 = vmatprep.subr.bf16.mxu0 %v652
    %861 = vmatpush1.bf16.msra.mxu0 %v651
    %862 = vmatprep.subr.bf16.mxu0 %v654
    %863 = vmatpush1.bf16.msra.mxu0 %v653
    %864 = vmatprep.subr.bf16.mxu0 %v656
    %865 = vmatpush1.bf16.msra.mxu0 %v655
    %866 = vmatprep.subr.bf16.mxu0 %v658
    %867 = vmatpush1.bf16.msra.mxu0 %v657
    %868 = vmatprep.subr.bf16.mxu0 %v660
    %869 = vmatpush1.bf16.msra.mxu0 %v659
    %870 = vmatprep.subr.bf16.mxu0 %v662
    %871 = vmatpush1.bf16.msra.mxu0 %v661
    %872 = vmatprep.mubr.bf16.mxu0 %v298
    %873 = vmatmul.mubr.bf16.gmra.mrb[0].mxu0 %v296
    %v874 = vpop.f32.mrb[0].mxu0
    %v875 = vadd.f32 %v834, %v874
    %v876 = vpop.f32.mrb[0].mxu0
    %v877 = vadd.f32 %v836, %v876
    %v878 = vpop.f32.mrb[0].mxu0
    %v879 = vpop.f32.mrb[0].mxu0
    %880 = vdwg.mxu0
    %881 = vmatprep.subr.bf16.mxu0 %v664
    %882 = vmatpush1.bf16.msra.mxu0 %v663
    %883 = vmatprep.subr.bf16.mxu0 %v666
    %884 = vmatpush1.bf16.msra.mxu0 %v665
    %885 = vmatprep.subr.bf16.mxu0 %v668
    %886 = vmatpush1.bf16.msra.mxu0 %v667
    %887 = vmatprep.subr.bf16.mxu0 %v670
    %888 = vmatpush1.bf16.msra.mxu0 %v669
    %889 = vmatprep.subr.bf16.mxu0 %v672
    %890 = vmatpush1.bf16.msra.mxu0 %v671
    %891 = vmatprep.subr.bf16.mxu0 %v674
    %892 = vmatpush1.bf16.msra.mxu0 %v673
    %893 = vmatprep.subr.bf16.mxu0 %v676
    %894 = vmatpush1.bf16.msra.mxu0 %v675
    %895 = vmatprep.subr.bf16.mxu0 %v678
    %896 = vmatpush1.bf16.msra.mxu0 %v677
    %897 = vmatprep.subr.bf16.mxu0 %v680
    %898 = vmatpush1.bf16.msra.mxu0 %v679
    %899 = vmatprep.subr.bf16.mxu0 %v682
    %900 = vmatpush1.bf16.msra.mxu0 %v681
    %901 = vmatprep.subr.bf16.mxu0 %v684
    %902 = vmatpush1.bf16.msra.mxu0 %v683
    %903 = vmatprep.subr.bf16.mxu0 %v686
    %904 = vmatpush1.bf16.msra.mxu0 %v685
    %905 = vmatprep.subr.bf16.mxu0 %v688
    %906 = vmatpush1.bf16.msra.mxu0 %v687
    %907 = vmatprep.subr.bf16.mxu0 %v690
    %908 = vmatpush1.bf16.msra.mxu0 %v689
    %909 = vmatprep.subr.bf16.mxu0 %v692
    %910 = vmatpush1.bf16.msra.mxu0 %v691
    %911 = vmatprep.subr.bf16.mxu0 %v694
    %912 = vmatpush1.bf16.msra.mxu0 %v693
    %913 = vmatprep.mubr.bf16.mxu0 %v295
    %914 = vmatmul.mubr.bf16.gmra.mrb[0].mxu0 %v281
    %v915 = vpop.f32.mrb[0].mxu0
    %v916 = vadd.f32 %v875, %v915
    %v917 = vpop.f32.mrb[0].mxu0
    %v918 = vadd.f32 %v877, %v917
    %v919 = vpop.f32.mrb[0].mxu0
    %v920 = vpop.f32.mrb[0].mxu0
    %921 = vdwg.mxu0
    %922 = vmatprep.subr.bf16.mxu0 %v696
    %923 = vmatpush1.bf16.msra.mxu0 %v695
    %924 = vmatprep.subr.bf16.mxu0 0
    %925 = vmatpush1.bf16.msra.mxu0 0
    %926 = vmatprep.subr.bf16.mxu0 0
    %927 = vmatpush1.bf16.msra.mxu0 0
    %928 = vmatprep.subr.bf16.mxu0 0
    %929 = vmatpush1.bf16.msra.mxu0 0
    %930 = vmatprep.subr.bf16.mxu0 0
    %931 = vmatpush1.bf16.msra.mxu0 0
    %932 = vmatprep.subr.bf16.mxu0 0
    %933 = vmatpush1.bf16.msra.mxu0 0
    %934 = vmatprep.subr.bf16.mxu0 0
    %935 = vmatpush1.bf16.msra.mxu0 0
    %936 = vmatprep.subr.bf16.mxu0 0
    %937 = vmatpush1.bf16.msra.mxu0 0
    %938 = vmatprep.subr.bf16.mxu0 0
    %939 = vmatpush1.bf16.msra.mxu0 0
    %940 = vmatprep.subr.bf16.mxu0 0
    %941 = vmatpush1.bf16.msra.mxu0 0
    %942 = vmatprep.subr.bf16.mxu0 0
    %943 = vmatpush1.bf16.msra.mxu0 0
    %944 = vmatprep.subr.bf16.mxu0 0
    %945 = vmatpush1.bf16.msra.mxu0 0
    %946 = vmatprep.subr.bf16.mxu0 0
    %947 = vmatpush1.bf16.msra.mxu0 0
    %948 = vmatprep.subr.bf16.mxu0 0
    %949 = vmatpush1.bf16.msra.mxu0 0
    %950 = vmatprep.subr.bf16.mxu0 0
    %951 = vmatpush1.bf16.msra.mxu0 0
    %952 = vmatprep.subr.bf16.mxu0 0
    %953 = vmatpush1.bf16.msra.mxu0 0
    %954 = vmatprep.mubr.bf16.mxu0 0
    %955 = vmatmul.mubr.bf16.gmra.mrb[0].mxu0 %v797
    %v956 = vpop.f32.mrb[0].mxu0
    %v957 = vadd.f32 %v916, %v956
    %v958 = vpop.f32.mrb[0].mxu0
    %v959 = vadd.f32 %v918, %v958
    %v960 = vpop.f32.mrb[0].mxu0
    %v961 = vpop.f32.mrb[0].mxu0
    %962 = vdwg.mxu0
    %v963 = vmax.f32 %v957, 0.0
    %v964 = vmax.f32 %v959, 0.0
    %v965 = vpack.c.bf16 %v963, %v963
    %v966 = vpack.c.bf16 %v964, %v964
    %v967 = vld [vmem:[#allocation7] sm:$0xff]
    %v968 = vld [vmem:[#allocation7 + $0x8] sm:$0xff]
    %v969 = vld [vmem:[#allocation7 + $0x10] sm:$0xff]
    %v970 = vld [vmem:[#allocation7 + $0x18] sm:$0xff]
    %v971 = vld [vmem:[#allocation7 + $0x20] sm:$0xff]
    %v972 = vld [vmem:[#allocation7 + $0x28] sm:$0xff]
    %v973 = vld [vmem:[#allocation7 + $0x30] sm:$0xff]
    %v974 = vld [vmem:[#allocation7 + $0x38] sm:$0xff]
    %v975 = vld [vmem:[#allocation7 + $0x40] sm:$0xff]
    %v976 = vld [vmem:[#allocation7 + $0x48] sm:$0xff]
    %v977 = vld [vmem:[#allocation7 + $0x50] sm:$0xff]
    %v978 = vld [vmem:[#allocation7 + $0x58] sm:$0xff]
    %v979 = vld [vmem:[#allocation7 + $0x60] sm:$0xff]
    %v980 = vld [vmem:[#allocation7 + $0x68] sm:$0xff]
    %v981 = vld [vmem:[#allocation7 + $0x70] sm:$0xff]
    %v982 = vld [vmem:[#allocation7 + $0x78] sm:$0xff]
    %v983 = vld [vmem:[#allocation7 + $0x80] sm:$0xff]
    %v984 = vld [vmem:[#allocation7 + $0x88] sm:$0xff]
    %v985 = vld [vmem:[#allocation7 + $0x90] sm:$0xff]
    %v986 = vld [vmem:[#allocation7 + $0x98] sm:$0xff]
    %v987 = vld [vmem:[#allocation7 + $0xa0] sm:$0xff]
    %v988 = vld [vmem:[#allocation7 + $0xa8] sm:$0xff]
    %v989 = vld [vmem:[#allocation7 + $0xb0] sm:$0xff]
    %v990 = vld [vmem:[#allocation7 + $0xb8] sm:$0xff]
    %v991 = vld [vmem:[#allocation7 + $0xc0] sm:$0xff]
    %v992 = vld [vmem:[#allocation7 + $0xc8] sm:$0xff]
    %v993 = vld [vmem:[#allocation7 + $0xd0] sm:$0xff]
    %v994 = vld [vmem:[#allocation7 + $0xd8] sm:$0xff]
    %v995 = vld [vmem:[#allocation7 + $0xe0] sm:$0xff]
    %v996 = vld [vmem:[#allocation7 + $0xe8] sm:$0xff]
    %v997 = vld [vmem:[#allocation7 + $0xf0] sm:$0xff]
    %v998 = vld [vmem:[#allocation7 + $0xf8] sm:$0xff]
    %v999 = vld [vmem:[%s4] sm:$0x3]
    %v1001 = vlaneseq
    %v1002 = vshrl.u32 %v1001, 7
    %v1003 = vsub.s32 0, %v1002
    %v1004 = vrot.slane %v999, %v1003
    %v1005 = vlaneseq
    %v1006 = vshrl.u32 %v1005, 7
    %v1007 = vsub.s32 1, %v1006
    %v1008 = vrot.slane %v999, %v1007
    %v1043 = vunpack.c.l.b16 %v967
    %v1044 = vunpack.c.h.b16 %v967
    %v1045 = vunpack.c.l.b16 %v968
    %v1046 = vunpack.c.h.b16 %v968
    %v1047 = vunpack.c.l.b16 %v969
    %v1048 = vunpack.c.h.b16 %v969
    %v1049 = vunpack.c.l.b16 %v970
    %v1050 = vunpack.c.h.b16 %v970
    %v1051 = vunpack.c.l.b16 %v971
    %v1052 = vunpack.c.h.b16 %v971
    %v1053 = vunpack.c.l.b16 %v972
    %v1054 = vunpack.c.h.b16 %v972
    %v1055 = vunpack.c.l.b16 %v973
    %v1056 = vunpack.c.h.b16 %v973
    %v1057 = vunpack.c.l.b16 %v974
    %v1058 = vunpack.c.h.b16 %v974
    %v1059 = vunpack.c.l.b16 %v975
    %v1060 = vunpack.c.h.b16 %v975
    %v1061 = vunpack.c.l.b16 %v976
    %v1062 = vunpack.c.h.b16 %v976
    %v1063 = vunpack.c.l.b16 %v977
    %v1064 = vunpack.c.h.b16 %v977
    %v1065 = vunpack.c.l.b16 %v978
    %v1066 = vunpack.c.h.b16 %v978
    %v1067 = vunpack.c.l.b16 %v979
    %v1068 = vunpack.c.h.b16 %v979
    %v1069 = vunpack.c.l.b16 %v980
    %v1070 = vunpack.c.h.b16 %v980
    %v1071 = vunpack.c.l.b16 %v981
    %v1072 = vunpack.c.h.b16 %v981
    %v1073 = vunpack.c.l.b16 %v982
    %v1074 = vunpack.c.h.b16 %v982
    %v1075 = vunpack.c.l.b16 %v983
    %v1076 = vunpack.c.h.b16 %v983
    %v1077 = vunpack.c.l.b16 %v984
    %v1078 = vunpack.c.h.b16 %v984
    %v1079 = vunpack.c.l.b16 %v985
    %v1080 = vunpack.c.h.b16 %v985
    %v1081 = vunpack.c.l.b16 %v986
    %v1082 = vunpack.c.h.b16 %v986
    %v1083 = vunpack.c.l.b16 %v987
    %v1084 = vunpack.c.h.b16 %v987
    %v1085 = vunpack.c.l.b16 %v988
    %v1086 = vunpack.c.h.b16 %v988
    %v1087 = vunpack.c.l.b16 %v989
    %v1088 = vunpack.c.h.b16 %v989
    %v1089 = vunpack.c.l.b16 %v990
    %v1090 = vunpack.c.h.b16 %v990
    %v1091 = vunpack.c.l.b16 %v991
    %v1092 = vunpack.c.h.b16 %v991
    %v1093 = vunpack.c.l.b16 %v992
    %v1094 = vunpack.c.h.b16 %v992
    %v1095 = vunpack.c.l.b16 %v993
    %v1096 = vunpack.c.h.b16 %v993
    %v1097 = vunpack.c.l.b16 %v994
    %v1098 = vunpack.c.h.b16 %v994
    %v1099 = vunpack.c.l.b16 %v995
    %v1100 = vunpack.c.h.b16 %v995
    %v1101 = vunpack.c.l.b16 %v996
    %v1102 = vunpack.c.h.b16 %v996
    %v1103 = vunpack.c.l.b16 %v997
    %v1104 = vunpack.c.h.b16 %v997
    %v1105 = vunpack.c.l.b16 %v998
    %v1106 = vunpack.c.h.b16 %v998
    %v1107 = vpack.c.b16 %v1045, %v1043
    %v1108 = vpack.c.b16 %v1046, %v1044
    %v1109 = vpack.c.b16 %v1049, %v1047
    %v1110 = vpack.c.b16 %v1050, %v1048
    %v1111 = vpack.c.b16 %v1053, %v1051
    %v1112 = vpack.c.b16 %v1054, %v1052
    %v1113 = vpack.c.b16 %v1057, %v1055
    %v1114 = vpack.c.b16 %v1058, %v1056
    %v1115 = vpack.c.b16 %v1061, %v1059
    %v1116 = vpack.c.b16 %v1062, %v1060
    %v1117 = vpack.c.b16 %v1065, %v1063
    %v1118 = vpack.c.b16 %v1066, %v1064
    %v1119 = vpack.c.b16 %v1069, %v1067
    %v1120 = vpack.c.b16 %v1070, %v1068
    %v1121 = vpack.c.b16 %v1073, %v1071
    %v1122 = vpack.c.b16 %v1074, %v1072
    %v1123 = vpack.c.b16 %v1077, %v1075
    %v1124 = vpack.c.b16 %v1078, %v1076
    %v1125 = vpack.c.b16 %v1081, %v1079
    %v1126 = vpack.c.b16 %v1082, %v1080
    %v1127 = vpack.c.b16 %v1085, %v1083
    %v1128 = vpack.c.b16 %v1086, %v1084
    %v1129 = vpack.c.b16 %v1089, %v1087
    %v1130 = vpack.c.b16 %v1090, %v1088
    %v1131 = vpack.c.b16 %v1093, %v1091
    %v1132 = vpack.c.b16 %v1094, %v1092
    %v1133 = vpack.c.b16 %v1097, %v1095
    %v1134 = vpack.c.b16 %v1098, %v1096
    %v1135 = vpack.c.b16 %v1101, %v1099
    %v1136 = vpack.c.b16 %v1102, %v1100
    %v1137 = vpack.c.b16 %v1105, %v1103
    %v1138 = vpack.c.b16 %v1106, %v1104
    %1171 = vmatprep.subr.bf16.mxu0 %v1108
    %1172 = vmatpush1.bf16.msra.mxu0 %v1107
    %1173 = vmatprep.subr.bf16.mxu0 %v1110
    %1174 = vmatpush1.bf16.msra.mxu0 %v1109
    %1175 = vmatprep.subr.bf16.mxu0 %v1112
    %1176 = vmatpush1.bf16.msra.mxu0 %v1111
    %1177 = vmatprep.subr.bf16.mxu0 %v1114
    %1178 = vmatpush1.bf16.msra.mxu0 %v1113
    %1179 = vmatprep.subr.bf16.mxu0 %v1116
    %1180 = vmatpush1.bf16.msra.mxu0 %v1115
    %1181 = vmatprep.subr.bf16.mxu0 %v1118
    %1182 = vmatpush1.bf16.msra.mxu0 %v1117
    %1183 = vmatprep.subr.bf16.mxu0 %v1120
    %1184 = vmatpush1.bf16.msra.mxu0 %v1119
    %1185 = vmatprep.subr.bf16.mxu0 %v1122
    %1186 = vmatpush1.bf16.msra.mxu0 %v1121
    %1187 = vmatprep.subr.bf16.mxu0 %v1124
    %1188 = vmatpush1.bf16.msra.mxu0 %v1123
    %1189 = vmatprep.subr.bf16.mxu0 %v1126
    %1190 = vmatpush1.bf16.msra.mxu0 %v1125
    %1191 = vmatprep.subr.bf16.mxu0 %v1128
    %1192 = vmatpush1.bf16.msra.mxu0 %v1127
    %1193 = vmatprep.subr.bf16.mxu0 %v1130
    %1194 = vmatpush1.bf16.msra.mxu0 %v1129
    %1195 = vmatprep.subr.bf16.mxu0 %v1132
    %1196 = vmatpush1.bf16.msra.mxu0 %v1131
    %1197 = vmatprep.subr.bf16.mxu0 %v1134
    %1198 = vmatpush1.bf16.msra.mxu0 %v1133
    %1199 = vmatprep.subr.bf16.mxu0 %v1136
    %1200 = vmatpush1.bf16.msra.mxu0 %v1135
    %1201 = vmatprep.subr.bf16.mxu0 %v1138
    %1202 = vmatpush1.bf16.msra.mxu0 %v1137
    %1203 = vmatprep.mubr.bf16.mxu0 %v966
    %1204 = vmatmul.mubr.bf16.gmra.mrb[0].mxu0 %v965
    %v1205 = vpop.f32.mrb[0].mxu0
    %v1206 = vadd.f32 %v1004, %v1205
    %v1207 = vpop.f32.mrb[0].mxu0
    %v1208 = vadd.f32 %v1008, %v1207
    %v1209 = vpop.f32.mrb[0].mxu0
    %v1210 = vpop.f32.mrb[0].mxu0
    %1211 = vdwg.mxu0
    %v1212 = vmax.f32 %v1206, 0.0
    %v1213 = vmax.f32 %v1208, 0.0
    %v1214 = vpack.c.bf16 %v1212, %v1212
    %v1215 = vpack.c.bf16 %v1213, %v1213
    %v1216 = vld [vmem:[#allocation8] sm:$0xff]
    %v1217 = vld [vmem:[#allocation8 + $0x8] sm:$0xff]
    %v1218 = vld [vmem:[#allocation8 + $0x10] sm:$0xff]
    %v1219 = vld [vmem:[#allocation8 + $0x18] sm:$0xff]
    %v1220 = vld [vmem:[#allocation8 + $0x20] sm:$0xff]
    %v1221 = vld [vmem:[#allocation8 + $0x28] sm:$0xff]
    %v1222 = vld [vmem:[#allocation8 + $0x30] sm:$0xff]
    %v1223 = vld [vmem:[#allocation8 + $0x38] sm:$0xff]
    %v1224 = vld [vmem:[#allocation8 + $0x40] sm:$0xff]
    %v1225 = vld [vmem:[#allocation8 + $0x48] sm:$0xff]
    %v1226 = vld [vmem:[#allocation8 + $0x50] sm:$0xff]
    %v1227 = vld [vmem:[#allocation8 + $0x58] sm:$0xff]
    %v1228 = vld [vmem:[#allocation8 + $0x60] sm:$0xff]
    %v1229 = vld [vmem:[#allocation8 + $0x68] sm:$0xff]
    %v1230 = vld [vmem:[#allocation8 + $0x70] sm:$0xff]
    %v1231 = vld [vmem:[#allocation8 + $0x78] sm:$0xff]
    %v1232 = vld [vmem:[#allocation8 + $0x80] sm:$0xff]
    %v1233 = vld [vmem:[#allocation8 + $0x88] sm:$0xff]
    %v1234 = vld [vmem:[#allocation8 + $0x90] sm:$0xff]
    %v1235 = vld [vmem:[#allocation8 + $0x98] sm:$0xff]
    %v1236 = vld [vmem:[#allocation8 + $0xa0] sm:$0xff]
    %v1237 = vld [vmem:[#allocation8 + $0xa8] sm:$0xff]
    %v1238 = vld [vmem:[#allocation8 + $0xb0] sm:$0xff]
    %v1239 = vld [vmem:[#allocation8 + $0xb8] sm:$0xff]
    %v1240 = vld [vmem:[#allocation8 + $0xc0] sm:$0xff]
    %v1241 = vld [vmem:[#allocation8 + $0xc8] sm:$0xff]
    %v1242 = vld [vmem:[#allocation8 + $0xd0] sm:$0xff]
    %v1243 = vld [vmem:[#allocation8 + $0xd8] sm:$0xff]
    %v1244 = vld [vmem:[#allocation8 + $0xe0] sm:$0xff]
    %v1245 = vld [vmem:[#allocation8 + $0xe8] sm:$0xff]
    %v1246 = vld [vmem:[#allocation8 + $0xf0] sm:$0xff]
    %v1247 = vld [vmem:[#allocation8 + $0xf8] sm:$0xff]
    %v1248 = vld [vmem:[%s6] sm:$0x3]
    %v1250 = vlaneseq
    %v1251 = vshrl.u32 %v1250, 7
    %v1252 = vsub.s32 0, %v1251
    %v1253 = vrot.slane %v1248, %v1252
    %v1254 = vlaneseq
    %v1255 = vshrl.u32 %v1254, 7
    %v1256 = vsub.s32 1, %v1255
    %v1257 = vrot.slane %v1248, %v1256
    %v1292 = vunpack.c.l.b16 %v1216
    %v1293 = vunpack.c.h.b16 %v1216
    %v1294 = vunpack.c.l.b16 %v1217
    %v1295 = vunpack.c.h.b16 %v1217
    %v1296 = vunpack.c.l.b16 %v1218
    %v1297 = vunpack.c.h.b16 %v1218
    %v1298 = vunpack.c.l.b16 %v1219
    %v1299 = vunpack.c.h.b16 %v1219
    %v1300 = vunpack.c.l.b16 %v1220
    %v1301 = vunpack.c.h.b16 %v1220
    %v1302 = vunpack.c.l.b16 %v1221
    %v1303 = vunpack.c.h.b16 %v1221
    %v1304 = vunpack.c.l.b16 %v1222
    %v1305 = vunpack.c.h.b16 %v1222
    %v1306 = vunpack.c.l.b16 %v1223
    %v1307 = vunpack.c.h.b16 %v1223
    %v1308 = vunpack.c.l.b16 %v1224
    %v1309 = vunpack.c.h.b16 %v1224
    %v1310 = vunpack.c.l.b16 %v1225
    %v1311 = vunpack.c.h.b16 %v1225
    %v1312 = vunpack.c.l.b16 %v1226
    %v1313 = vunpack.c.h.b16 %v1226
    %v1314 = vunpack.c.l.b16 %v1227
    %v1315 = vunpack.c.h.b16 %v1227
    %v1316 = vunpack.c.l.b16 %v1228
    %v1317 = vunpack.c.h.b16 %v1228
    %v1318 = vunpack.c.l.b16 %v1229
    %v1319 = vunpack.c.h.b16 %v1229
    %v1320 = vunpack.c.l.b16 %v1230
    %v1321 = vunpack.c.h.b16 %v1230
    %v1322 = vunpack.c.l.b16 %v1231
    %v1323 = vunpack.c.h.b16 %v1231
    %v1324 = vunpack.c.l.b16 %v1232
    %v1325 = vunpack.c.h.b16 %v1232
    %v1326 = vunpack.c.l.b16 %v1233
    %v1327 = vunpack.c.h.b16 %v1233
    %v1328 = vunpack.c.l.b16 %v1234
    %v1329 = vunpack.c.h.b16 %v1234
    %v1330 = vunpack.c.l.b16 %v1235
    %v1331 = vunpack.c.h.b16 %v1235
    %v1332 = vunpack.c.l.b16 %v1236
    %v1333 = vunpack.c.h.b16 %v1236
    %v1334 = vunpack.c.l.b16 %v1237
    %v1335 = vunpack.c.h.b16 %v1237
    %v1336 = vunpack.c.l.b16 %v1238
    %v1337 = vunpack.c.h.b16 %v1238
    %v1338 = vunpack.c.l.b16 %v1239
    %v1339 = vunpack.c.h.b16 %v1239
    %v1340 = vunpack.c.l.b16 %v1240
    %v1341 = vunpack.c.h.b16 %v1240
    %v1342 = vunpack.c.l.b16 %v1241
    %v1343 = vunpack.c.h.b16 %v1241
    %v1344 = vunpack.c.l.b16 %v1242
    %v1345 = vunpack.c.h.b16 %v1242
    %v1346 = vunpack.c.l.b16 %v1243
    %v1347 = vunpack.c.h.b16 %v1243
    %v1348 = vunpack.c.l.b16 %v1244
    %v1349 = vunpack.c.h.b16 %v1244
    %v1350 = vunpack.c.l.b16 %v1245
    %v1351 = vunpack.c.h.b16 %v1245
    %v1352 = vunpack.c.l.b16 %v1246
    %v1353 = vunpack.c.h.b16 %v1246
    %v1354 = vunpack.c.l.b16 %v1247
    %v1355 = vunpack.c.h.b16 %v1247
    %v1356 = vpack.c.b16 %v1294, %v1292
    %v1357 = vpack.c.b16 %v1295, %v1293
    %v1358 = vpack.c.b16 %v1298, %v1296
    %v1359 = vpack.c.b16 %v1299, %v1297
    %v1360 = vpack.c.b16 %v1302, %v1300
    %v1361 = vpack.c.b16 %v1303, %v1301
    %v1362 = vpack.c.b16 %v1306, %v1304
    %v1363 = vpack.c.b16 %v1307, %v1305
    %v1364 = vpack.c.b16 %v1310, %v1308
    %v1365 = vpack.c.b16 %v1311, %v1309
    %v1366 = vpack.c.b16 %v1314, %v1312
    %v1367 = vpack.c.b16 %v1315, %v1313
    %v1368 = vpack.c.b16 %v1318, %v1316
    %v1369 = vpack.c.b16 %v1319, %v1317
    %v1370 = vpack.c.b16 %v1322, %v1320
    %v1371 = vpack.c.b16 %v1323, %v1321
    %v1372 = vpack.c.b16 %v1326, %v1324
    %v1373 = vpack.c.b16 %v1327, %v1325
    %v1374 = vpack.c.b16 %v1330, %v1328
    %v1375 = vpack.c.b16 %v1331, %v1329
    %v1376 = vpack.c.b16 %v1334, %v1332
    %v1377 = vpack.c.b16 %v1335, %v1333
    %v1378 = vpack.c.b16 %v1338, %v1336
    %v1379 = vpack.c.b16 %v1339, %v1337
    %v1380 = vpack.c.b16 %v1342, %v1340
    %v1381 = vpack.c.b16 %v1343, %v1341
    %v1382 = vpack.c.b16 %v1346, %v1344
    %v1383 = vpack.c.b16 %v1347, %v1345
    %v1384 = vpack.c.b16 %v1350, %v1348
    %v1385 = vpack.c.b16 %v1351, %v1349
    %v1386 = vpack.c.b16 %v1354, %v1352
    %v1387 = vpack.c.b16 %v1355, %v1353
    %1420 = vmatprep.subr.bf16.mxu0 %v1357
    %1421 = vmatpush1.bf16.msra.mxu0 %v1356
    %1422 = vmatprep.subr.bf16.mxu0 %v1359
    %1423 = vmatpush1.bf16.msra.mxu0 %v1358
    %1424 = vmatprep.subr.bf16.mxu0 %v1361
    %1425 = vmatpush1.bf16.msra.mxu0 %v1360
    %1426 = vmatprep.subr.bf16.mxu0 %v1363
    %1427 = vmatpush1.bf16.msra.mxu0 %v1362
    %1428 = vmatprep.subr.bf16.mxu0 %v1365
    %1429 = vmatpush1.bf16.msra.mxu0 %v1364
    %1430 = vmatprep.subr.bf16.mxu0 %v1367
    %1431 = vmatpush1.bf16.msra.mxu0 %v1366
    %1432 = vmatprep.subr.bf16.mxu0 %v1369
    %1433 = vmatpush1.bf16.msra.mxu0 %v1368
    %1434 = vmatprep.subr.bf16.mxu0 %v1371
    %1435 = vmatpush1.bf16.msra.mxu0 %v1370
    %1436 = vmatprep.subr.bf16.mxu0 %v1373
    %1437 = vmatpush1.bf16.msra.mxu0 %v1372
    %1438 = vmatprep.subr.bf16.mxu0 %v1375
    %1439 = vmatpush1.bf16.msra.mxu0 %v1374
    %1440 = vmatprep.subr.bf16.mxu0 %v1377
    %1441 = vmatpush1.bf16.msra.mxu0 %v1376
    %1442 = vmatprep.subr.bf16.mxu0 %v1379
    %1443 = vmatpush1.bf16.msra.mxu0 %v1378
    %1444 = vmatprep.subr.bf16.mxu0 %v1381
    %1445 = vmatpush1.bf16.msra.mxu0 %v1380
    %1446 = vmatprep.subr.bf16.mxu0 %v1383
    %1447 = vmatpush1.bf16.msra.mxu0 %v1382
    %1448 = vmatprep.subr.bf16.mxu0 %v1385
    %1449 = vmatpush1.bf16.msra.mxu0 %v1384
    %1450 = vmatprep.subr.bf16.mxu0 %v1387
    %1451 = vmatpush1.bf16.msra.mxu0 %v1386
    %1452 = vmatprep.mubr.bf16.mxu0 %v1215
    %1453 = vmatmul.mubr.bf16.gmra.mrb[0].mxu0 %v1214
    %v1454 = vpop.f32.mrb[0].mxu0
    %v1455 = vadd.f32 %v1253, %v1454
    %v1456 = vpop.f32.mrb[0].mxu0
    %v1457 = vadd.f32 %v1257, %v1456
    %v1458 = vpop.f32.mrb[0].mxu0
    %v1459 = vpop.f32.mrb[0].mxu0
    %1460 = vdwg.mxu0
    %v1461 = vmax.f32 %v1455, 0.0
    %v1462 = vmax.f32 %v1457, 0.0
    %v1463 = vpack.c.bf16 %v1461, %v1461
    %v1464 = vpack.c.bf16 %v1462, %v1462
    %v1465 = vld [vmem:[#allocation10] sm:$0xf]
    %v1466 = vld [vmem:[#allocation10 + $0x4] sm:$0xf]
    %v1467 = vld [vmem:[#allocation10 + $0x8] sm:$0xf]
    %v1468 = vld [vmem:[#allocation10 + $0xc] sm:$0xf]
    %v1469 = vld [vmem:[#allocation10 + $0x10] sm:$0xf]
    %v1470 = vld [vmem:[#allocation10 + $0x14] sm:$0xf]
    %v1471 = vld [vmem:[#allocation10 + $0x18] sm:$0xf]
    %v1472 = vld [vmem:[#allocation10 + $0x1c] sm:$0xf]
    %v1473 = vld [vmem:[#allocation10 + $0x20] sm:$0xf]
    %v1474 = vld [vmem:[#allocation10 + $0x24] sm:$0xf]
    %v1475 = vld [vmem:[#allocation10 + $0x28] sm:$0xf]
    %v1476 = vld [vmem:[#allocation10 + $0x2c] sm:$0xf]
    %v1477 = vld [vmem:[#allocation10 + $0x30] sm:$0xf]
    %v1478 = vld [vmem:[#allocation10 + $0x34] sm:$0xf]
    %v1479 = vld [vmem:[#allocation10 + $0x38] sm:$0xf]
    %v1480 = vld [vmem:[#allocation10 + $0x3c] sm:$0xf]
    %v1481 = vld [vmem:[#allocation10 + $0x40] sm:$0xf]
    %v1482 = vld [vmem:[#allocation10 + $0x44] sm:$0xf]
    %v1483 = vld [vmem:[#allocation10 + $0x48] sm:$0xf]
    %v1484 = vld [vmem:[#allocation10 + $0x4c] sm:$0xf]
    %v1485 = vld [vmem:[#allocation10 + $0x50] sm:$0xf]
    %v1486 = vld [vmem:[#allocation10 + $0x54] sm:$0xf]
    %v1487 = vld [vmem:[#allocation10 + $0x58] sm:$0xf]
    %v1488 = vld [vmem:[#allocation10 + $0x5c] sm:$0xf]
    %v1489 = vld [vmem:[#allocation10 + $0x60] sm:$0xf]
    %v1490 = vld [vmem:[#allocation10 + $0x64] sm:$0xf]
    %v1491 = vld [vmem:[#allocation10 + $0x68] sm:$0xf]
    %v1492 = vld [vmem:[#allocation10 + $0x6c] sm:$0xf]
    %v1493 = vld [vmem:[#allocation10 + $0x70] sm:$0xf]
    %v1494 = vld [vmem:[#allocation10 + $0x74] sm:$0xf]
    %v1495 = vld [vmem:[#allocation10 + $0x78] sm:$0xf]
    %v1496 = vld [vmem:[#allocation10 + $0x7c] sm:$0xf]
    %v1497 = vld [vmem:[%s8] sm:$0x1]
    %v1499 = vlaneseq
    %v1500 = vshrl.u32 %v1499, 7
    %v1501 = vsub.s32 0, %v1500
    %v1502 = vrot.slane %v1497, %v1501
    %v1536 = vunpack.c.l.b16 %v1465
    %v1537 = vunpack.c.l.b16 %v1466
    %v1538 = vunpack.c.l.b16 %v1467
    %v1539 = vunpack.c.l.b16 %v1468
    %v1540 = vunpack.c.l.b16 %v1469
    %v1541 = vunpack.c.l.b16 %v1470
    %v1542 = vunpack.c.l.b16 %v1471
    %v1543 = vunpack.c.l.b16 %v1472
    %v1544 = vunpack.c.l.b16 %v1473
    %v1545 = vunpack.c.l.b16 %v1474
    %v1546 = vunpack.c.l.b16 %v1475
    %v1547 = vunpack.c.l.b16 %v1476
    %v1548 = vunpack.c.l.b16 %v1477
    %v1549 = vunpack.c.l.b16 %v1478
    %v1550 = vunpack.c.l.b16 %v1479
    %v1551 = vunpack.c.l.b16 %v1480
    %v1552 = vunpack.c.l.b16 %v1481
    %v1553 = vunpack.c.l.b16 %v1482
    %v1554 = vunpack.c.l.b16 %v1483
    %v1555 = vunpack.c.l.b16 %v1484
    %v1556 = vunpack.c.l.b16 %v1485
    %v1557 = vunpack.c.l.b16 %v1486
    %v1558 = vunpack.c.l.b16 %v1487
    %v1559 = vunpack.c.l.b16 %v1488
    %v1560 = vunpack.c.l.b16 %v1489
    %v1561 = vunpack.c.l.b16 %v1490
    %v1562 = vunpack.c.l.b16 %v1491
    %v1563 = vunpack.c.l.b16 %v1492
    %v1564 = vunpack.c.l.b16 %v1493
    %v1565 = vunpack.c.l.b16 %v1494
    %v1566 = vunpack.c.l.b16 %v1495
    %v1567 = vunpack.c.l.b16 %v1496
    %v1568 = vpack.c.b16 %v1537, %v1536
    %v1569 = vpack.c.b16 %v1539, %v1538
    %v1570 = vpack.c.b16 %v1541, %v1540
    %v1571 = vpack.c.b16 %v1543, %v1542
    %v1572 = vpack.c.b16 %v1545, %v1544
    %v1573 = vpack.c.b16 %v1547, %v1546
    %v1574 = vpack.c.b16 %v1549, %v1548
    %v1575 = vpack.c.b16 %v1551, %v1550
    %v1576 = vpack.c.b16 %v1553, %v1552
    %v1577 = vpack.c.b16 %v1555, %v1554
    %v1578 = vpack.c.b16 %v1557, %v1556
    %v1579 = vpack.c.b16 %v1559, %v1558
    %v1580 = vpack.c.b16 %v1561, %v1560
    %v1581 = vpack.c.b16 %v1563, %v1562
    %v1582 = vpack.c.b16 %v1565, %v1564
    %v1583 = vpack.c.b16 %v1567, %v1566
    %1600 = vmatprep.subr.bf16.mxu0 0
    %1601 = vmatpush1.bf16.msra.mxu0 %v1568
    %1602 = vmatprep.subr.bf16.mxu0 0
    %1603 = vmatpush1.bf16.msra.mxu0 %v1569
    %1604 = vmatprep.subr.bf16.mxu0 0
    %1605 = vmatpush1.bf16.msra.mxu0 %v1570
    %1606 = vmatprep.subr.bf16.mxu0 0
    %1607 = vmatpush1.bf16.msra.mxu0 %v1571
    %1608 = vmatprep.subr.bf16.mxu0 0
    %1609 = vmatpush1.bf16.msra.mxu0 %v1572
    %1610 = vmatprep.subr.bf16.mxu0 0
    %1611 = vmatpush1.bf16.msra.mxu0 %v1573
    %1612 = vmatprep.subr.bf16.mxu0 0
    %1613 = vmatpush1.bf16.msra.mxu0 %v1574
    %1614 = vmatprep.subr.bf16.mxu0 0
    %1615 = vmatpush1.bf16.msra.mxu0 %v1575
    %1616 = vmatprep.subr.bf16.mxu0 0
    %1617 = vmatpush1.bf16.msra.mxu0 %v1576
    %1618 = vmatprep.subr.bf16.mxu0 0
    %1619 = vmatpush1.bf16.msra.mxu0 %v1577
    %1620 = vmatprep.subr.bf16.mxu0 0
    %1621 = vmatpush1.bf16.msra.mxu0 %v1578
    %1622 = vmatprep.subr.bf16.mxu0 0
    %1623 = vmatpush1.bf16.msra.mxu0 %v1579
    %1624 = vmatprep.subr.bf16.mxu0 0
    %1625 = vmatpush1.bf16.msra.mxu0 %v1580
    %1626 = vmatprep.subr.bf16.mxu0 0
    %1627 = vmatpush1.bf16.msra.mxu0 %v1581
    %1628 = vmatprep.subr.bf16.mxu0 0
    %1629 = vmatpush1.bf16.msra.mxu0 %v1582
    %1630 = vmatprep.subr.bf16.mxu0 0
    %1631 = vmatpush1.bf16.msra.mxu0 %v1583
    %1632 = vmatprep.mubr.bf16.mxu0 %v1464
    %1633 = vmatmul.mubr.bf16.gmra.mrb[0].mxu0 %v1463
    %v1634 = vpop.f32.mrb[0].mxu0
    %v1635 = vadd.f32 %v1502, %v1634
    %v1636 = vpop.f32.mrb[0].mxu0
    %v1637 = vpop.f32.mrb[0].mxu0
    %v1638 = vpop.f32.mrb[0].mxu0
    %1639 = vdwg.mxu0
    %v1640 = vmax.f32 %v1635, 0.0
    %v1641 = vpack.c.bf16 %v1640, %v1640
    %v1642 = vld [vmem:[#allocation11] sm:$0xf]
    %v1643 = vld [vmem:[#allocation11 + $0x4] sm:$0xf]
    %v1644 = vld [vmem:[#allocation11 + $0x8] sm:$0xf]
    %v1645 = vld [vmem:[#allocation11 + $0xc] sm:$0xf]
    %v1646 = vld [vmem:[#allocation11 + $0x10] sm:$0xf]
    %v1647 = vld [vmem:[#allocation11 + $0x14] sm:$0xf]
    %v1648 = vld [vmem:[#allocation11 + $0x18] sm:$0xf]
    %v1649 = vld [vmem:[#allocation11 + $0x1c] sm:$0xf]
    %v1650 = vld [vmem:[#allocation11 + $0x20] sm:$0xf]
    %v1651 = vld [vmem:[#allocation11 + $0x24] sm:$0xf]
    %v1652 = vld [vmem:[#allocation11 + $0x28] sm:$0xf]
    %v1653 = vld [vmem:[#allocation11 + $0x2c] sm:$0xf]
    %v1654 = vld [vmem:[#allocation11 + $0x30] sm:$0xf]
    %v1655 = vld [vmem:[#allocation11 + $0x34] sm:$0xf]
    %v1656 = vld [vmem:[#allocation11 + $0x38] sm:$0xf]
    %v1657 = vld [vmem:[#allocation11 + $0x3c] sm:$0xf]
    %v1658 = vld [vmem:[%s10] sm:$0x1]
    %v1660 = vlaneseq
    %v1661 = vshrl.u32 %v1660, 7
    %v1662 = vsub.s32 0, %v1661
    %v1663 = vrot.slane %v1658, %v1662
    %v1681 = vunpack.c.l.b16 %v1642
    %v1682 = vunpack.c.l.b16 %v1643
    %v1683 = vunpack.c.l.b16 %v1644
    %v1684 = vunpack.c.l.b16 %v1645
    %v1685 = vunpack.c.l.b16 %v1646
    %v1686 = vunpack.c.l.b16 %v1647
    %v1687 = vunpack.c.l.b16 %v1648
    %v1688 = vunpack.c.l.b16 %v1649
    %v1689 = vunpack.c.l.b16 %v1650
    %v1690 = vunpack.c.l.b16 %v1651
    %v1691 = vunpack.c.l.b16 %v1652
    %v1692 = vunpack.c.l.b16 %v1653
    %v1693 = vunpack.c.l.b16 %v1654
    %v1694 = vunpack.c.l.b16 %v1655
    %v1695 = vunpack.c.l.b16 %v1656
    %v1696 = vunpack.c.l.b16 %v1657
    %v1697 = vpack.c.b16 %v1682, %v1681
    %v1698 = vpack.c.b16 %v1684, %v1683
    %v1699 = vpack.c.b16 %v1686, %v1685
    %v1700 = vpack.c.b16 %v1688, %v1687
    %v1701 = vpack.c.b16 %v1690, %v1689
    %v1702 = vpack.c.b16 %v1692, %v1691
    %v1703 = vpack.c.b16 %v1694, %v1693
    %v1704 = vpack.c.b16 %v1696, %v1695
    %1713 = vmatprep.subr.bf16.mxu0 0
    %1714 = vmatpush1.bf16.msra.mxu0 %v1697
    %1715 = vmatprep.subr.bf16.mxu0 0
    %1716 = vmatpush1.bf16.msra.mxu0 %v1698
    %1717 = vmatprep.subr.bf16.mxu0 0
    %1718 = vmatpush1.bf16.msra.mxu0 %v1699
    %1719 = vmatprep.subr.bf16.mxu0 0
    %1720 = vmatpush1.bf16.msra.mxu0 %v1700
    %1721 = vmatprep.subr.bf16.mxu0 0
    %1722 = vmatpush1.bf16.msra.mxu0 %v1701
    %1723 = vmatprep.subr.bf16.mxu0 0
    %1724 = vmatpush1.bf16.msra.mxu0 %v1702
    %1725 = vmatprep.subr.bf16.mxu0 0
    %1726 = vmatpush1.bf16.msra.mxu0 %v1703
    %1727 = vmatprep.subr.bf16.mxu0 0
    %1728 = vmatpush1.bf16.msra.mxu0 %v1704
    %1729 = vmatprep.subr.bf16.mxu0 0
    %1730 = vmatpush1.bf16.msra.mxu0 0
    %1731 = vmatprep.subr.bf16.mxu0 0
    %1732 = vmatpush1.bf16.msra.mxu0 0
    %1733 = vmatprep.subr.bf16.mxu0 0
    %1734 = vmatpush1.bf16.msra.mxu0 0
    %1735 = vmatprep.subr.bf16.mxu0 0
    %1736 = vmatpush1.bf16.msra.mxu0 0
    %1737 = vmatprep.subr.bf16.mxu0 0
    %1738 = vmatpush1.bf16.msra.mxu0 0
    %1739 = vmatprep.subr.bf16.mxu0 0
    %1740 = vmatpush1.bf16.msra.mxu0 0
    %1741 = vmatprep.subr.bf16.mxu0 0
    %1742 = vmatpush1.bf16.msra.mxu0 0
    %1743 = vmatprep.subr.bf16.mxu0 0
    %1744 = vmatpush1.bf16.msra.mxu0 0
    %1745 = vmatprep.mubr.bf16.mxu0 0
    %1746 = vmatmul.mubr.bf16.gmra.mrb[0].mxu0 %v1641
    %v1747 = vpop.f32.mrb[0].mxu0
    %v1748 = vadd.f32 %v1663, %v1747
    %v1749 = vpop.f32.mrb[0].mxu0
    %v1750 = vpop.f32.mrb[0].mxu0
    %v1751 = vpop.f32.mrb[0].mxu0
    %1752 = vdwg.mxu0
    %v1753 = vmax.f32 %v1748, 0.0
    %v1754 = vpack.c.bf16 %v1753, %v1753
    %v1755 = vld [vmem:[#allocation13] sm:$0xf]
    %v1756 = vld [vmem:[#allocation13 + $0x4] sm:$0xf]
    %v1757 = vld [vmem:[#allocation13 + $0x8] sm:$0xf]
    %v1758 = vld [vmem:[#allocation13 + $0xc] sm:$0xf]
    %v1759 = vld [vmem:[#allocation13 + $0x10] sm:$0xf]
    %v1760 = vld [vmem:[#allocation13 + $0x14] sm:$0xf]
    %v1761 = vld [vmem:[#allocation13 + $0x18] sm:$0xf]
    %v1762 = vld [vmem:[#allocation13 + $0x1c] sm:$0xf]
    %v1763 = vld [vmem:[#allocation13 + $0x20] sm:$0xf]
    %v1764 = vld [vmem:[#allocation13 + $0x24] sm:$0xf]
    %v1765 = vld [vmem:[#allocation13 + $0x28] sm:$0xf]
    %v1766 = vld [vmem:[#allocation13 + $0x2c] sm:$0xf]
    %v1767 = vld [vmem:[#allocation13 + $0x30] sm:$0xf]
    %v1768 = vld [vmem:[#allocation13 + $0x34] sm:$0xf]
    %v1769 = vld [vmem:[#allocation13 + $0x38] sm:$0xf]
    %v1770 = vld [vmem:[#allocation13 + $0x3c] sm:$0xf]
    %v1771 = vld [vmem:[%s12] sm:$0x1]
    %v1773 = vlaneseq
    %v1774 = vshrl.u32 %v1773, 7
    %v1775 = vsub.s32 0, %v1774
    %v1776 = vrot.slane %v1771, %v1775
    %v1794 = vunpack.c.l.b16 %v1755
    %v1795 = vunpack.c.l.b16 %v1756
    %v1796 = vunpack.c.l.b16 %v1757
    %v1797 = vunpack.c.l.b16 %v1758
    %v1798 = vunpack.c.l.b16 %v1759
    %v1799 = vunpack.c.l.b16 %v1760
    %v1800 = vunpack.c.l.b16 %v1761
    %v1801 = vunpack.c.l.b16 %v1762
    %v1802 = vunpack.c.l.b16 %v1763
    %v1803 = vunpack.c.l.b16 %v1764
    %v1804 = vunpack.c.l.b16 %v1765
    %v1805 = vunpack.c.l.b16 %v1766
    %v1806 = vunpack.c.l.b16 %v1767
    %v1807 = vunpack.c.l.b16 %v1768
    %v1808 = vunpack.c.l.b16 %v1769
    %v1809 = vunpack.c.l.b16 %v1770
    %v1810 = vpack.c.b16 %v1795, %v1794
    %v1811 = vpack.c.b16 %v1797, %v1796
    %v1812 = vpack.c.b16 %v1799, %v1798
    %v1813 = vpack.c.b16 %v1801, %v1800
    %v1814 = vpack.c.b16 %v1803, %v1802
    %v1815 = vpack.c.b16 %v1805, %v1804
    %v1816 = vpack.c.b16 %v1807, %v1806
    %v1817 = vpack.c.b16 %v1809, %v1808
    %1826 = vmatprep.subr.bf16.mxu0 0
    %1827 = vmatpush1.bf16.msra.mxu0 %v1810
    %1828 = vmatprep.subr.bf16.mxu0 0
    %1829 = vmatpush1.bf16.msra.mxu0 %v1811
    %1830 = vmatprep.subr.bf16.mxu0 0
    %1831 = vmatpush1.bf16.msra.mxu0 %v1812
    %1832 = vmatprep.subr.bf16.mxu0 0
    %1833 = vmatpush1.bf16.msra.mxu0 %v1813
    %1834 = vmatprep.subr.bf16.mxu0 0
    %1835 = vmatpush1.bf16.msra.mxu0 %v1814
    %1836 = vmatprep.subr.bf16.mxu0 0
    %1837 = vmatpush1.bf16.msra.mxu0 %v1815
    %1838 = vmatprep.subr.bf16.mxu0 0
    %1839 = vmatpush1.bf16.msra.mxu0 %v1816
    %1840 = vmatprep.subr.bf16.mxu0 0
    %1841 = vmatpush1.bf16.msra.mxu0 %v1817
    %1842 = vmatprep.subr.bf16.mxu0 0
    %1843 = vmatpush1.bf16.msra.mxu0 0
    %1844 = vmatprep.subr.bf16.mxu0 0
    %1845 = vmatpush1.bf16.msra.mxu0 0
    %1846 = vmatprep.subr.bf16.mxu0 0
    %1847 = vmatpush1.bf16.msra.mxu0 0
    %1848 = vmatprep.subr.bf16.mxu0 0
    %1849 = vmatpush1.bf16.msra.mxu0 0
    %1850 = vmatprep.subr.bf16.mxu0 0
    %1851 = vmatpush1.bf16.msra.mxu0 0
    %1852 = vmatprep.subr.bf16.mxu0 0
    %1853 = vmatpush1.bf16.msra.mxu0 0
    %1854 = vmatprep.subr.bf16.mxu0 0
    %1855 = vmatpush1.bf16.msra.mxu0 0
    %1856 = vmatprep.subr.bf16.mxu0 0
    %1857 = vmatpush1.bf16.msra.mxu0 0
    %1858 = vmatprep.mubr.bf16.mxu0 0
    %1859 = vmatmul.mubr.bf16.gmra.mrb[0].mxu0 %v1754
    %v1860 = vpop.f32.mrb[0].mxu0
    %v1861 = vadd.f32 %v1776, %v1860
    %v1862 = vpop.f32.mrb[0].mxu0
    %v1863 = vpop.f32.mrb[0].mxu0
    %v1864 = vpop.f32.mrb[0].mxu0
    %1865 = vdwg.mxu0
    %1866 = vst [vmem:[#allocation14] sm:$0x3] %v1861
    // Predicated region
    $region82: #{tpu_custom_call.1} parent=1 // pred_check
      _
    $region83: #{tpu_custom_call.1} parent=1 // pred_check_branch
      %1868 = sbr.rel (0) target = $region85
    $region84: #{tpu_custom_call.1} parent=1 // pred_region
      %s1870 = ssub.s32 32, 32
      %1871 = vsyncadd [#allocation4], %s1870
      %s1873 = sshll.u32 [#allocation14], 4
      %s1874 = int_to_ptr.vmem [resolvable:$true] %s1873
      %1876 = dma.vmem_to_hbm [thread:$0]  %s1874, 32, %s13, [#allocation4]
    $region85: #{tpu_custom_call.1} parent=1 // pred_fallthru
      _
    // Predicated region
    $region86: #{tpu_custom_call.1} parent=1 // pred_check
      _
    $region87: #{tpu_custom_call.1} parent=1 // pred_check_branch
      %1878 = sbr.rel (0) target = $region89
    $region88: #{tpu_custom_call.1} parent=1 // pred_region
      %1879 = dma.done [#allocation4], 32
    $region89: #{tpu_custom_call.1} parent=1 // pred_fallthru
      _
    %1880 = vsyncpa [#allocation3], 1
    %1881 = vsyncpa [#allocation6], 1
    %1882 = vsyncpa [#allocation9], 1
    %1883 = vsyncpa [#allocation12], 1
    %1884 = vsyncpa [#allocation4], 1

</llo_original>
